<compile_context>
chip_gen: v6e
topology: v6e:2x2x1
jax: 0.10.0
libtpu: 0.0.40
codegen_flags: <defaults>
</compile_context>

<pallas_src>
import functools

import numpy as np
import jax
import jax.numpy as jnp
from jax.experimental import pallas as pl
from jax.experimental.pallas import tpu as pltpu


def _cross_attn_kernel(gamma_ref,            # SMEM (1,)            f32
                       x_hsi_ref,            # VMEM (1, C_hsi, TQ)  f32
                       x_msi_ref,            # VMEM (1, C_msi, Nm)  f32 / bf16
                       wq_ref, bq_ref,       # (C_out, C_hsi), (C_out, 1)
                       wk_ref, bk_ref,       # (C_out, C_msi), (C_out, 1)
                       wv_ref, bv_ref,       # (C_out, C_msi), (C_out, 1)
                       out_ref,              # VMEM (1, C_out, TQ)  f32
                       kt_ref,               # VMEM scratch (Nm, C_out)
                       v_ref,                # VMEM scratch (C_out, Nm)
                       *, matmul_dtype=None):
    # ---- per-batch K/V projection, hoisted out of the query-tile loop ------
    @pl.when(pl.program_id(1) == 0)
    def _():
        x_m = x_msi_ref[0]                                            # (C_msi, Nm)
        k = jnp.dot(wk_ref[...], x_m,
                    preferred_element_type=jnp.float32) + bk_ref[...]
        v = jnp.dot(wv_ref[...], x_m,
                    preferred_element_type=jnp.float32) + bv_ref[...]
        kt_ref[...] = k.T.astype(kt_ref.dtype)   # one transpose per batch
        v_ref[...] = v.astype(v_ref.dtype)

    # ---- per-query-tile work -----------------------------------------------
    x_h = x_hsi_ref[0]                                                # (C_hsi, TQ) f32
    x_hq = x_h if matmul_dtype is None else x_h.astype(matmul_dtype)
    q = jnp.dot(wq_ref[...], x_hq,
                preferred_element_type=jnp.float32) + bq_ref[...]     # (C_out, TQ)
    if matmul_dtype is not None:
        q = q.astype(matmul_dtype)

    # energy_t[j, i] = <k_j, q_i>; lane axis stays TQ so the softmax stats are
    # (1, TQ) row vectors that broadcast directly against the (C_out, TQ) out.
    energy_t = jnp.dot(kt_ref[...], q,
                       preferred_element_type=jnp.float32)            # (Nm, TQ)

    # Softmax over the key axis (axis 0), f32 elementwise (v5e-safe).
    # TODO(synk): add flash-style online softmax over Nm chunks for very large
    # msi resolutions where the (C_msi, Nm) slab / (Nm, TQ) tiles exceed VMEM.
    m = jnp.max(energy_t, axis=0, keepdims=True)                      # (1, TQ)
    p = jnp.exp(energy_t - m)                                         # (Nm, TQ)
    denom = jnp.sum(p, axis=0, keepdims=True)                         # (1, TQ)
    inv = pl.reciprocal(denom, approx=matmul_dtype is not None)       # (1, TQ)

    if matmul_dtype is not None:
        p = p.astype(matmul_dtype)
    raw = jnp.dot(v_ref[...], p,
                  preferred_element_type=jnp.float32)                 # (C_out, TQ)

    # gamma folded into the deferred normalization; f32 residual add.
    out_ref[0] = raw * (gamma_ref[0] * inv) + x_h


def _vmem_budgets():
    """Generation-aware (choose_budget, scoped_vmem_limit) in bytes."""
    cap = 64 << 20                          # conservative default (v7x per-TC VMEM)
    try:
        info = pltpu.get_tpu_info()
        cap = int(getattr(info, "vmem_capacity_bytes", cap) or cap)
    except Exception:
        pass
    choose_budget = (cap * 3) // 8          # ~48 MiB on v5e/v6e, ~24 MiB on v7x
    vmem_limit = max(32 << 20, (cap * 3) // 4)   # ~96 MiB / ~48 MiB
    return choose_budget, min(vmem_limit, 96 << 20)


def _step_vmem_bytes(tq, nm, c_hsi, c_msi, c_out, act_bytes, w_bytes):
    """Rough per-grid-step VMEM footprint with single-buffered invariants."""
    f32 = 4
    blocks = (2 * c_hsi * tq * f32               # x_hsi tile (double buffered)
              + 2 * c_out * tq * f32             # output tile (double buffered)
              + c_msi * nm * act_bytes           # x_msi slab (single buffered)
              + c_out * (c_hsi + 2 * c_msi) * w_bytes
              + 3 * c_out * f32)
    scratch = 2 * nm * c_out * w_bytes           # persistent K^T / V scratch
    interm = (3 * c_out * tq + 3 * nm * tq) * f32
    return blocks + scratch + interm


def _choose_tq(n, nm, c_hsi, c_msi, c_out, act_bytes, w_bytes, budget_bytes):
    def fits(tq):
        return _step_vmem_bytes(tq, nm, c_hsi, c_msi, c_out,
                                act_bytes, w_bytes) <= budget_bytes
    if n <= 512 and fits(n):
        return n                                  # single full-extent tile
    for cand in (2048, 1024, 512, 256, 128):      # lane-dense 128-multiples
        if cand < n and fits(cand):
            return cand
    return min(n, 128)


def cross_attention_block(z_hsi, z_msi, params, *, matmul_dtype=None, tq=None):
    """z_hsi: (B, C_hsi, H, W), z_msi: (B, C_msi, Hm, Wm) -> (B, C_out, H, W)."""
    wq, bq, wk, bk, wv, bv, gamma = params
    B, C_hsi, H, W = z_hsi.shape
    _, C_msi, Hm, Wm = z_msi.shape
    C_out = wq.shape[0]
    # The residual gamma * out + z_hsi requires matching channel counts.
    assert C_out == C_hsi, "out_channels must equal hsi_channels for the residual"

    # F.interpolate(..., 'nearest', integer scale) repeats each msi pixel r^2
    # times; repeated keys/values cancel under softmax, so attend over the Nm
    # unique keys/values and never materialize the upsample.
    if H > Hm:
        assert H % Hm == 0 and W % Wm == 0, (
            "only integer nearest-neighbour upsampling is supported")
    else:
        assert (Hm, Wm) == (H, W), "msi spatial size must match hsi when not upsampling"

    N = H * W
    Nm = Hm * Wm

    x_h = z_hsi.astype(jnp.float32).reshape(B, C_hsi, N)   # free reshapes
    x_m = z_msi.reshape(B, C_msi, Nm)

    w_dtype = jnp.float32 if matmul_dtype is None else matmul_dtype
    kv_dtype = w_dtype
    wq_c = wq.astype(w_dtype)
    wk_c = wk.astype(w_dtype)
    wv_c = wv.astype(w_dtype)
    x_m = x_m.astype(jnp.float32 if matmul_dtype is None else matmul_dtype)
    bq2 = bq.astype(jnp.float32).reshape(C_out, 1)
    bk2 = bk.astype(jnp.float32).reshape(C_out, 1)
    bv2 = bv.astype(jnp.float32).reshape(C_out, 1)
    gamma = gamma.astype(jnp.float32).reshape(1)

    act_bytes = jnp.dtype(x_m.dtype).itemsize
    w_bytes = jnp.dtype(w_dtype).itemsize

    choose_budget, vmem_limit = _vmem_budgets()
    TQ = tq if tq is not None else _choose_tq(N, Nm, C_hsi, C_msi, C_out,
                                              act_bytes, w_bytes, choose_budget)

    # Pad the query/spatial axis so it always tiles cleanly (no monolithic
    # fallback for non-divisible N); pad columns compute independent garbage
    # under the per-column softmax and are sliced off afterwards.
    n_tiles = -(-N // TQ)
    Np = n_tiles * TQ
    if Np != N:
        x_h = jnp.pad(x_h, ((0, 0), (0, 0), (0, Np - N)))
    grid = (B, n_tiles)

    flops = 2 * B * (Np * C_hsi * C_out            # Q projection
                     + Nm * C_msi * 2 * C_out      # per-batch K/V projection
                     + 2 * Np * Nm * C_out)        # energy + attn @ V
    bytes_accessed = (x_h.size * 4 + x_m.size * act_bytes
                      + B * C_out * Np * 4
                      + (wq_c.size + wk_c.size + wv_c.size) * w_bytes
                      + (bq2.size + bk2.size + bv2.size + 1) * 4)
    cost = pl.CostEstimate(flops=int(flops),
                           transcendentals=int(B * Np * Nm),
                           bytes_accessed=int(bytes_accessed))

    kernel = functools.partial(_cross_attn_kernel, matmul_dtype=matmul_dtype)

    def build_call(single_buffer):
        def inv_spec(shape, index_map):
            # Grid-invariant inputs: single-buffer to reclaim VMEM (v7x).
            if single_buffer:
                return pl.BlockSpec(shape, index_map,
                                    pipeline_mode=pl.Buffered(1))
            return pl.BlockSpec(shape, index_map)

        return pl.pallas_call(
            kernel,
            out_shape=jax.ShapeDtypeStruct((B, C_out, Np), jnp.float32),
            grid=grid,
            in_specs=[
                pl.BlockSpec(memory_space=pltpu.MemorySpace.SMEM),        # gamma
                pl.BlockSpec((1, C_hsi, TQ), lambda b, qi: (b, 0, qi)),   # x_hsi tile
                inv_spec((1, C_msi, Nm), lambda b, qi: (b, 0, 0)),        # x_msi slab
                inv_spec((C_out, C_hsi), lambda b, qi: (0, 0)),           # wq
                inv_spec((C_out, 1), lambda b, qi: (0, 0)),               # bq
                inv_spec((C_out, C_msi), lambda b, qi: (0, 0)),           # wk
                inv_spec((C_out, 1), lambda b, qi: (0, 0)),               # bk
                inv_spec((C_out, C_msi), lambda b, qi: (0, 0)),           # wv
                inv_spec((C_out, 1), lambda b, qi: (0, 0)),               # bv
            ],
            out_specs=pl.BlockSpec((1, C_out, TQ), lambda b, qi: (b, 0, qi)),
            scratch_shapes=[pltpu.VMEM((Nm, C_out), kv_dtype),            # K^T
                            pltpu.VMEM((C_out, Nm), kv_dtype)],           # V
            compiler_params=pltpu.CompilerParams(
                # Batch stays parallel (megacore shards over B); the query-tile
                # axis must be arbitrary because of the persistent K/V scratch.
                dimension_semantics=("parallel", "arbitrary"),
                vmem_limit_bytes=int(vmem_limit)),
            cost_estimate=cost,
        )

    args = (gamma, x_h, x_m, wq_c, bq2, wk_c, bk2, wv_c, bv2)
    try:
        out_cn = jax.block_until_ready(build_call(single_buffer=True)(*args))
    except Exception:
        # Runtime does not accept pl.Buffered(1) single-buffering: fall back
        # to default double-buffered BlockSpecs (correct, slightly more VMEM).
        out_cn = build_call(single_buffer=False)(*args)

    if Np != N:
        out_cn = out_cn[:, :, :N]
    return out_cn.reshape(B, C_out, H, W)


def cross_attention_block_ref(z_hsi, z_msi, params):
    """Pure-JAX reference mirroring the PyTorch forward exactly (incl. upsample)."""
    wq, bq, wk, bk, wv, bv, gamma = params
    B, C_hsi, H, W = z_hsi.shape
    if H > z_msi.shape[-2]:
        sx, sy = H // z_msi.shape[-2], W // z_msi.shape[-1]
        z_msi = jnp.repeat(jnp.repeat(z_msi, sx, axis=2), sy, axis=3)
    N = H * W
    hi = jax.lax.Precision.HIGHEST

    def conv1x1(x, w, b):  # x: (B, Cin, H, W), w: (Cout, Cin), b: (Cout,)
        return jnp.einsum('bihw,oi->bohw', x, w, precision=hi) + b[None, :, None, None]

    q = conv1x1(z_hsi, wq, bq).reshape(B, -1, N).transpose(0, 2, 1)   # (B, N, C)
    k = conv1x1(z_msi, wk, bk).reshape(B, -1, N)                      # (B, C, N)
    v = conv1x1(z_msi, wv, bv).reshape(B, -1, N)                      # (B, C, N)
    energy = jnp.einsum('bnc,bcm->bnm', q, k, precision=hi)
    attn = jax.nn.softmax(energy, axis=-1)
    out = jnp.einsum('bcm,bnm->bcn', v, attn, precision=hi).reshape(B, -1, H, W)
    return gamma[0] * out + z_hsi


if __name__ == "__main__":
    B, C_hsi, C_msi, C_out = 2, 4, 6, 4   # residual requires C_out == C_hsi

    key = jax.random.PRNGKey(0)
    k0, k1, k2, k3, k4, k5, k6, k7, k8, k9 = jax.random.split(key, 10)

    # Conv2d 1x1 weights collapsed to (Cout, Cin).
    wq = jax.random.normal(k2, (C_out, C_hsi), dtype=jnp.float32) * 0.2
    bq = jax.random.normal(k3, (C_out,), dtype=jnp.float32) * 0.1
    wk = jax.random.normal(k4, (C_out, C_msi), dtype=jnp.float32) * 0.2
    bk = jax.random.normal(k5, (C_out,), dtype=jnp.float32) * 0.1
    wv = jax.random.normal(k6, (C_out, C_msi), dtype=jnp.float32) * 0.2
    bv = jax.random.normal(k7, (C_out,), dtype=jnp.float32) * 0.1
    # PyTorch __init__ sets gamma = zeros(1); use a nonzero value so the
    # attention path actually contributes to the tested output.
    gamma = jnp.array([0.5], dtype=jnp.float32)
    params = (wq, bq, wk, bk, wv, bv, gamma)

    # --- test 1: small single-tile case, exact f32 path ---------------------
    H = W = 8       # N = 64
    Hm = Wm = 4     # Nm = 16 (2x nearest upsample is skipped in-kernel)
    z_hsi = jax.random.normal(k0, (B, C_hsi, H, W), dtype=jnp.float32)
    z_msi = jax.random.normal(k1, (B, C_msi, Hm, Wm), dtype=jnp.float32)
    ref = cross_attention_block_ref(z_hsi, z_msi, params)

    out = jax.block_until_ready(cross_attention_block(z_hsi, z_msi, params))
    assert out.shape == (B, C_out, H, W)
    np.testing.assert_allclose(np.asarray(out), np.asarray(ref), rtol=1e-5, atol=1e-5)

    # bf16-operand MXU path (all four matmuls bf16, f32 accumulation/softmax).
    out_bf16 = jax.block_until_ready(
        cross_attention_block(z_hsi, z_msi, params, matmul_dtype=jnp.bfloat16))
    np.testing.assert_allclose(np.asarray(out_bf16), np.asarray(ref),
                               rtol=5e-2, atol=5e-2)

    # --- test 2: multi-tile + non-divisible N (padding) + hoisted K/V reuse --
    H2 = W2 = 12    # N = 144 (not a multiple of 128 -> padded to 256)
    Hm2 = Wm2 = 6   # Nm = 36
    z_hsi2 = jax.random.normal(k8, (B, C_hsi, H2, W2), dtype=jnp.float32)
    z_msi2 = jax.random.normal(k9, (B, C_msi, Hm2, Wm2), dtype=jnp.float32)
    ref2 = cross_attention_block_ref(z_hsi2, z_msi2, params)
    out2 = jax.block_until_ready(
        cross_attention_block(z_hsi2, z_msi2, params, tq=128))  # 2 query tiles per batch
    np.testing.assert_allclose(np.asarray(out2), np.asarray(ref2), rtol=1e-5, atol=1e-5)

    print("KERNEL_OK")
</pallas_src>

<mosaic_0001>
module attributes {stable_mosaic.version = 11 : i64} {
  func.func @_cross_attn_kernel(%arg0: i32, %arg1: i32, %arg2: memref<1xf32, #tpu.memory_space<smem>>, %arg3: memref<1x4x64xf32, #tpu.memory_space<vmem>>, %arg4: memref<1x6x16xf32, #tpu.memory_space<vmem>>, %arg5: memref<4x4xf32, #tpu.memory_space<vmem>>, %arg6: memref<4x1xf32, #tpu.memory_space<vmem>>, %arg7: memref<4x6xf32, #tpu.memory_space<vmem>>, %arg8: memref<4x1xf32, #tpu.memory_space<vmem>>, %arg9: memref<4x6xf32, #tpu.memory_space<vmem>>, %arg10: memref<4x1xf32, #tpu.memory_space<vmem>>, %arg11: memref<1x4x64xf32, #tpu.memory_space<vmem>>, %arg12: memref<16x4xf32, #tpu.memory_space<vmem>>, %arg13: memref<4x16xf32, #tpu.memory_space<vmem>>) attributes {dimension_semantics = [#tpu.dimension_semantics<parallel>, #tpu.dimension_semantics<arbitrary>], iteration_bounds = array<i64: 2, 1>, scalar_prefetch = 0 : i64, scratch_operands = 2 : i64, tpu.core_type = #tpu.core_type<tc>, window_params = [{transform_indices = @transform_0, window_bounds = array<i64: 1>}, {transform_indices = @transform_1, window_bounds = array<i64: 1, 4, 64>}, {pipeline_mode = #tpu.pipeline_mode<synchronous>, transform_indices = @transform_2, window_bounds = array<i64: 1, 6, 16>}, {pipeline_mode = #tpu.pipeline_mode<synchronous>, transform_indices = @transform_3, window_bounds = array<i64: 4, 4>}, {pipeline_mode = #tpu.pipeline_mode<synchronous>, transform_indices = @transform_4, window_bounds = array<i64: 4, 1>}, {pipeline_mode = #tpu.pipeline_mode<synchronous>, transform_indices = @transform_5, window_bounds = array<i64: 4, 6>}, {pipeline_mode = #tpu.pipeline_mode<synchronous>, transform_indices = @transform_6, window_bounds = array<i64: 4, 1>}, {pipeline_mode = #tpu.pipeline_mode<synchronous>, transform_indices = @transform_7, window_bounds = array<i64: 4, 6>}, {pipeline_mode = #tpu.pipeline_mode<synchronous>, transform_indices = @transform_8, window_bounds = array<i64: 4, 1>}, {transform_indices = @transform_9, window_bounds = array<i64: 1, 4, 64>}]} {
    %c0_i32 = arith.constant 0 : i32
    %0 = arith.cmpi eq, %arg1, %c0_i32 : i32
    %1 = arith.extui %0 : i1 to i32
    %c0_i32_0 = arith.constant 0 : i32
    %2 = arith.cmpi ne, %1, %c0_i32_0 : i32
    scf.if %2 {
      %c0_19 = arith.constant 0 : index
      %c0_20 = arith.constant 0 : index
      %c0_21 = arith.constant 0 : index
      %31 = vector.load %arg4[%c0_19, %c0_20, %c0_21] : memref<1x6x16xf32, #tpu.memory_space<vmem>>, vector<1x6x16xf32>
      %32 = vector.shape_cast %31 : vector<1x6x16xf32> to vector<6x16xf32>
      %c0_22 = arith.constant 0 : index
      %c0_23 = arith.constant 0 : index
      %33 = vector.load %arg7[%c0_22, %c0_23] : memref<4x6xf32, #tpu.memory_space<vmem>>, vector<4x6xf32>
      %cst_24 = arith.constant dense<0.000000e+00> : vector<4x16xf32>
      %34 = tpu.matmul %33, %32, %cst_24 {dimension_numbers = #tpu.dot_dimension_numbers<[1], [0], [0], [1], [0, 0, 1, 1], [], []>} : vector<4x6xf32>, vector<6x16xf32>, vector<4x16xf32> -> vector<4x16xf32>
      %c0_25 = arith.constant 0 : index
      %c0_26 = arith.constant 0 : index
      %35 = vector.load %arg8[%c0_25, %c0_26] : memref<4x1xf32, #tpu.memory_space<vmem>>, vector<4x1xf32>
      %36 = vector.broadcast %35 : vector<4x1xf32> to vector<4x16xf32>
      %37 = arith.addf %34, %36 : vector<4x16xf32>
      %c0_27 = arith.constant 0 : index
      %c0_28 = arith.constant 0 : index
      %38 = vector.load %arg9[%c0_27, %c0_28] : memref<4x6xf32, #tpu.memory_space<vmem>>, vector<4x6xf32>
      %cst_29 = arith.constant dense<0.000000e+00> : vector<4x16xf32>
      %39 = tpu.matmul %38, %32, %cst_29 {dimension_numbers = #tpu.dot_dimension_numbers<[1], [0], [0], [1], [0, 0, 1, 1], [], []>} : vector<4x6xf32>, vector<6x16xf32>, vector<4x16xf32> -> vector<4x16xf32>
      %c0_30 = arith.constant 0 : index
      %c0_31 = arith.constant 0 : index
      %40 = vector.load %arg10[%c0_30, %c0_31] : memref<4x1xf32, #tpu.memory_space<vmem>>, vector<4x1xf32>
      %41 = vector.broadcast %40 : vector<4x1xf32> to vector<4x16xf32>
      %42 = arith.addf %39, %41 : vector<4x16xf32>
      %43 = tpu.transpose %37, [1, 0] : vector<4x16xf32> -> vector<16x4xf32>
      %c0_32 = arith.constant 0 : index
      %c0_33 = arith.constant 0 : index
      %44 = vector.load %arg12[%c0_32, %c0_33] : memref<16x4xf32, #tpu.memory_space<vmem>>, vector<16x4xf32>
      tpu.vector_store %arg12[%c0_32, %c0_33], %43 {strides = array<i32>} : memref<16x4xf32, #tpu.memory_space<vmem>>, vector<16x4xf32>,
      %c0_34 = arith.constant 0 : index
      %c0_35 = arith.constant 0 : index
      %45 = vector.load %arg13[%c0_34, %c0_35] : memref<4x16xf32, #tpu.memory_space<vmem>>, vector<4x16xf32>
      tpu.vector_store %arg13[%c0_34, %c0_35], %42 {strides = array<i32>} : memref<4x16xf32, #tpu.memory_space<vmem>>, vector<4x16xf32>,
    } else {
    }
    %c0 = arith.constant 0 : index
    %c0_1 = arith.constant 0 : index
    %c0_2 = arith.constant 0 : index
    %3 = vector.load %arg3[%c0, %c0_1, %c0_2] : memref<1x4x64xf32, #tpu.memory_space<vmem>>, vector<1x4x64xf32>
    %4 = vector.shape_cast %3 : vector<1x4x64xf32> to vector<4x64xf32>
    %c0_3 = arith.constant 0 : index
    %c0_4 = arith.constant 0 : index
    %5 = vector.load %arg5[%c0_3, %c0_4] : memref<4x4xf32, #tpu.memory_space<vmem>>, vector<4x4xf32>
    %cst = arith.constant dense<0.000000e+00> : vector<4x64xf32>
    %6 = tpu.matmul %5, %4, %cst {dimension_numbers = #tpu.dot_dimension_numbers<[1], [0], [0], [1], [0, 0, 1, 1], [], []>} : vector<4x4xf32>, vector<4x64xf32>, vector<4x64xf32> -> vector<4x64xf32>
    %c0_5 = arith.constant 0 : index
    %c0_6 = arith.constant 0 : index
    %7 = vector.load %arg6[%c0_5, %c0_6] : memref<4x1xf32, #tpu.memory_space<vmem>>, vector<4x1xf32>
    %8 = vector.broadcast %7 : vector<4x1xf32> to vector<4x64xf32>
    %9 = arith.addf %6, %8 : vector<4x64xf32>
    %c0_7 = arith.constant 0 : index
    %c0_8 = arith.constant 0 : index
    %10 = vector.load %arg12[%c0_7, %c0_8] : memref<16x4xf32, #tpu.memory_space<vmem>>, vector<16x4xf32>
    %cst_9 = arith.constant dense<0.000000e+00> : vector<16x64xf32>
    %11 = tpu.matmul %10, %9, %cst_9 {dimension_numbers = #tpu.dot_dimension_numbers<[1], [0], [0], [1], [0, 0, 1, 1], [], []>} : vector<16x4xf32>, vector<4x64xf32>, vector<16x64xf32> -> vector<16x64xf32>
    %cst_10 = arith.constant dense<0xFF800000> : vector<64xf32>
    %12 = vector.multi_reduction <maximumf>, %11, %cst_10 [0] : vector<16x64xf32> to vector<64xf32>
    %13 = vector.shape_cast %12 : vector<64xf32> to vector<1x64xf32>
    %14 = vector.broadcast %13 : vector<1x64xf32> to vector<16x64xf32>
    %15 = arith.subf %11, %14 : vector<16x64xf32>
    %16 = math.exp %15 : vector<16x64xf32>
    %cst_11 = arith.constant dense<0.000000e+00> : vector<64xf32>
    %17 = vector.multi_reduction <add>, %16, %cst_11 [0] : vector<16x64xf32> to vector<64xf32>
    %18 = vector.shape_cast %17 : vector<64xf32> to vector<1x64xf32>
    %19 = tpu.reciprocal %18 : vector<1x64xf32> -> vector<1x64xf32>
    %c0_12 = arith.constant 0 : index
    %c0_13 = arith.constant 0 : index
    %20 = vector.load %arg13[%c0_12, %c0_13] : memref<4x16xf32, #tpu.memory_space<vmem>>, vector<4x16xf32>
    %cst_14 = arith.constant dense<0.000000e+00> : vector<4x64xf32>
    %21 = tpu.matmul %20, %16, %cst_14 {dimension_numbers = #tpu.dot_dimension_numbers<[1], [0], [0], [1], [0, 0, 1, 1], [], []>} : vector<4x16xf32>, vector<16x64xf32>, vector<4x64xf32> -> vector<4x64xf32>
    %c0_15 = arith.constant 0 : index
    %22 = memref.load %arg2[%c0_15] : memref<1xf32, #tpu.memory_space<smem>>
    %23 = vector.broadcast %22 : f32 to vector<1x64xf32>
    %24 = arith.mulf %23, %19 : vector<1x64xf32>
    %25 = vector.broadcast %24 : vector<1x64xf32> to vector<4x64xf32>
    %26 = arith.mulf %21, %25 : vector<4x64xf32>
    %27 = arith.addf %26, %4 : vector<4x64xf32>
    %c0_16 = arith.constant 0 : index
    %c0_17 = arith.constant 0 : index
    %c0_18 = arith.constant 0 : index
    %28 = vector.load %arg11[%c0_16, %c0_17, %c0_18] : memref<1x4x64xf32, #tpu.memory_space<vmem>>, vector<1x4x64xf32>
    %29 = vector.shape_cast %28 : vector<1x4x64xf32> to vector<4x64xf32>
    %30 = vector.shape_cast %27 : vector<4x64xf32> to vector<1x4x64xf32>
    tpu.vector_store %arg11[%c0_16, %c0_17, %c0_18], %30 {strides = array<i32>} : memref<1x4x64xf32, #tpu.memory_space<vmem>>, vector<1x4x64xf32>,
    return
  }
  func.func @transform_0(%arg0: i32, %arg1: i32) -> i32 {
    %c0_i32 = arith.constant 0 : i32
    %c0_i32_0 = arith.constant 0 : i32
    return %c0_i32 : i32
  }
  func.func @transform_1(%arg0: i32, %arg1: i32) -> (i32, i32, i32) {
    %c0_i32 = arith.constant 0 : i32
    %c0_i32_0 = arith.constant 0 : i32
    return %arg0, %c0_i32, %arg1 : i32, i32, i32
  }
  func.func @transform_2(%arg0: i32, %arg1: i32) -> (i32, i32, i32) {
    %c0_i32 = arith.constant 0 : i32
    %c0_i32_0 = arith.constant 0 : i32
    %c0_i32_1 = arith.constant 0 : i32
    return %arg0, %c0_i32, %c0_i32_0 : i32, i32, i32
  }
  func.func @transform_3(%arg0: i32, %arg1: i32) -> (i32, i32) {
    %c0_i32 = arith.constant 0 : i32
    %c0_i32_0 = arith.constant 0 : i32
    %c0_i32_1 = arith.constant 0 : i32
    return %c0_i32, %c0_i32_0 : i32, i32
  }
  func.func @transform_4(%arg0: i32, %arg1: i32) -> (i32, i32) {
    %c0_i32 = arith.constant 0 : i32
    %c0_i32_0 = arith.constant 0 : i32
    %c0_i32_1 = arith.constant 0 : i32
    return %c0_i32, %c0_i32_0 : i32, i32
  }
  func.func @transform_5(%arg0: i32, %arg1: i32) -> (i32, i32) {
    %c0_i32 = arith.constant 0 : i32
    %c0_i32_0 = arith.constant 0 : i32
    %c0_i32_1 = arith.constant 0 : i32
    return %c0_i32, %c0_i32_0 : i32, i32
  }
  func.func @transform_6(%arg0: i32, %arg1: i32) -> (i32, i32) {
    %c0_i32 = arith.constant 0 : i32
    %c0_i32_0 = arith.constant 0 : i32
    %c0_i32_1 = arith.constant 0 : i32
    return %c0_i32, %c0_i32_0 : i32, i32
  }
  func.func @transform_7(%arg0: i32, %arg1: i32) -> (i32, i32) {
    %c0_i32 = arith.constant 0 : i32
    %c0_i32_0 = arith.constant 0 : i32
    %c0_i32_1 = arith.constant 0 : i32
    return %c0_i32, %c0_i32_0 : i32, i32
  }
  func.func @transform_8(%arg0: i32, %arg1: i32) -> (i32, i32) {
    %c0_i32 = arith.constant 0 : i32
    %c0_i32_0 = arith.constant 0 : i32
    %c0_i32_1 = arith.constant 0 : i32
    return %c0_i32, %c0_i32_0 : i32, i32
  }
  func.func @transform_9(%arg0: i32, %arg1: i32) -> (i32, i32, i32) {
    %c0_i32 = arith.constant 0 : i32
    %c0_i32_0 = arith.constant 0 : i32
    return %arg0, %c0_i32, %arg1 : i32, i32, i32
  }
}

module attributes {stable_mosaic.version = 11 : i64} {
  func.func @_cross_attn_kernel(%arg0: i32, %arg1: i32, %arg2: memref<1xf32, #tpu.memory_space<smem>>, %arg3: memref<1x4x64xf32, #tpu.memory_space<vmem>>, %arg4: memref<1x6x16xf32, #tpu.memory_space<vmem>>, %arg5: memref<4x4xf32, #tpu.memory_space<vmem>>, %arg6: memref<4x1xf32, #tpu.memory_space<vmem>>, %arg7: memref<4x6xf32, #tpu.memory_space<vmem>>, %arg8: memref<4x1xf32, #tpu.memory_space<vmem>>, %arg9: memref<4x6xf32, #tpu.memory_space<vmem>>, %arg10: memref<4x1xf32, #tpu.memory_space<vmem>>, %arg11: memref<1x4x64xf32, #tpu.memory_space<vmem>>, %arg12: memref<16x4xf32, #tpu.memory_space<vmem>>, %arg13: memref<4x16xf32, #tpu.memory_space<vmem>>) attributes {dimension_semantics = [#tpu.dimension_semantics<parallel>, #tpu.dimension_semantics<arbitrary>], iteration_bounds = array<i64: 2, 1>, scalar_prefetch = 0 : i64, scratch_operands = 2 : i64, tpu.core_type = #tpu.core_type<tc>, window_params = [{transform_indices = @transform_0, window_bounds = array<i64: 1>}, {transform_indices = @transform_1, window_bounds = array<i64: 1, 4, 64>}, {transform_indices = @transform_2, window_bounds = array<i64: 1, 6, 16>}, {pipeline_mode = #tpu.pipeline_mode<synchronous>, transform_indices = @transform_3, window_bounds = array<i64: 4, 4>}, {pipeline_mode = #tpu.pipeline_mode<synchronous>, transform_indices = @transform_4, window_bounds = array<i64: 4, 1>}, {pipeline_mode = #tpu.pipeline_mode<synchronous>, transform_indices = @transform_5, window_bounds = array<i64: 4, 6>}, {pipeline_mode = #tpu.pipeline_mode<synchronous>, transform_indices = @transform_6, window_bounds = array<i64: 4, 1>}, {pipeline_mode = #tpu.pipeline_mode<synchronous>, transform_indices = @transform_7, window_bounds = array<i64: 4, 6>}, {pipeline_mode = #tpu.pipeline_mode<synchronous>, transform_indices = @transform_8, window_bounds = array<i64: 4, 1>}, {transform_indices = @transform_9, window_bounds = array<i64: 1, 4, 64>}]} {
    %c0_i32 = arith.constant 0 : i32
    %0 = arith.cmpi eq, %arg1, %c0_i32 : i32
    %1 = arith.extui %0 : i1 to i32
    %c0_i32_0 = arith.constant 0 : i32
    %2 = arith.cmpi ne, %1, %c0_i32_0 : i32
    scf.if %2 {
      %c0_19 = arith.constant 0 : index
      %c0_20 = arith.constant 0 : index
      %c0_21 = arith.constant 0 : index
      %31 = vector.load %arg4[%c0_19, %c0_20, %c0_21] : memref<1x6x16xf32, #tpu.memory_space<vmem>>, vector<1x6x16xf32>
      %32 = vector.shape_cast %31 : vector<1x6x16xf32> to vector<6x16xf32>
      %c0_22 = arith.constant 0 : index
      %c0_23 = arith.constant 0 : index
      %33 = vector.load %arg7[%c0_22, %c0_23] : memref<4x6xf32, #tpu.memory_space<vmem>>, vector<4x6xf32>
      %cst_24 = arith.constant dense<0.000000e+00> : vector<4x16xf32>
      %34 = tpu.matmul %33, %32, %cst_24 {dimension_numbers = #tpu.dot_dimension_numbers<[1], [0], [0], [1], [0, 0, 1, 1], [], []>} : vector<4x6xf32>, vector<6x16xf32>, vector<4x16xf32> -> vector<4x16xf32>
      %c0_25 = arith.constant 0 : index
      %c0_26 = arith.constant 0 : index
      %35 = vector.load %arg8[%c0_25, %c0_26] : memref<4x1xf32, #tpu.memory_space<vmem>>, vector<4x1xf32>
      %36 = vector.broadcast %35 : vector<4x1xf32> to vector<4x16xf32>
      %37 = arith.addf %34, %36 : vector<4x16xf32>
      %c0_27 = arith.constant 0 : index
      %c0_28 = arith.constant 0 : index
      %38 = vector.load %arg9[%c0_27, %c0_28] : memref<4x6xf32, #tpu.memory_space<vmem>>, vector<4x6xf32>
      %cst_29 = arith.constant dense<0.000000e+00> : vector<4x16xf32>
      %39 = tpu.matmul %38, %32, %cst_29 {dimension_numbers = #tpu.dot_dimension_numbers<[1], [0], [0], [1], [0, 0, 1, 1], [], []>} : vector<4x6xf32>, vector<6x16xf32>, vector<4x16xf32> -> vector<4x16xf32>
      %c0_30 = arith.constant 0 : index
      %c0_31 = arith.constant 0 : index
      %40 = vector.load %arg10[%c0_30, %c0_31] : memref<4x1xf32, #tpu.memory_space<vmem>>, vector<4x1xf32>
      %41 = vector.broadcast %40 : vector<4x1xf32> to vector<4x16xf32>
      %42 = arith.addf %39, %41 : vector<4x16xf32>
      %43 = tpu.transpose %37, [1, 0] : vector<4x16xf32> -> vector<16x4xf32>
      %c0_32 = arith.constant 0 : index
      %c0_33 = arith.constant 0 : index
      %44 = vector.load %arg12[%c0_32, %c0_33] : memref<16x4xf32, #tpu.memory_space<vmem>>, vector<16x4xf32>
      tpu.vector_store %arg12[%c0_32, %c0_33], %43 {strides = array<i32>} : memref<16x4xf32, #tpu.memory_space<vmem>>, vector<16x4xf32>,
      %c0_34 = arith.constant 0 : index
      %c0_35 = arith.constant 0 : index
      %45 = vector.load %arg13[%c0_34, %c0_35] : memref<4x16xf32, #tpu.memory_space<vmem>>, vector<4x16xf32>
      tpu.vector_store %arg13[%c0_34, %c0_35], %42 {strides = array<i32>} : memref<4x16xf32, #tpu.memory_space<vmem>>, vector<4x16xf32>,
    } else {
    }
    %c0 = arith.constant 0 : index
    %c0_1 = arith.constant 0 : index
    %c0_2 = arith.constant 0 : index
    %3 = vector.load %arg3[%c0, %c0_1, %c0_2] : memref<1x4x64xf32, #tpu.memory_space<vmem>>, vector<1x4x64xf32>
    %4 = vector.shape_cast %3 : vector<1x4x64xf32> to vector<4x64xf32>
    %c0_3 = arith.constant 0 : index
    %c0_4 = arith.constant 0 : index
    %5 = vector.load %arg5[%c0_3, %c0_4] : memref<4x4xf32, #tpu.memory_space<vmem>>, vector<4x4xf32>
    %cst = arith.constant dense<0.000000e+00> : vector<4x64xf32>
    %6 = tpu.matmul %5, %4, %cst {dimension_numbers = #tpu.dot_dimension_numbers<[1], [0], [0], [1], [0, 0, 1, 1], [], []>} : vector<4x4xf32>, vector<4x64xf32>, vector<4x64xf32> -> vector<4x64xf32>
    %c0_5 = arith.constant 0 : index
    %c0_6 = arith.constant 0 : index
    %7 = vector.load %arg6[%c0_5, %c0_6] : memref<4x1xf32, #tpu.memory_space<vmem>>, vector<4x1xf32>
    %8 = vector.broadcast %7 : vector<4x1xf32> to vector<4x64xf32>
    %9 = arith.addf %6, %8 : vector<4x64xf32>
    %c0_7 = arith.constant 0 : index
    %c0_8 = arith.constant 0 : index
    %10 = vector.load %arg12[%c0_7, %c0_8] : memref<16x4xf32, #tpu.memory_space<vmem>>, vector<16x4xf32>
    %cst_9 = arith.constant dense<0.000000e+00> : vector<16x64xf32>
    %11 = tpu.matmul %10, %9, %cst_9 {dimension_numbers = #tpu.dot_dimension_numbers<[1], [0], [0], [1], [0, 0, 1, 1], [], []>} : vector<16x4xf32>, vector<4x64xf32>, vector<16x64xf32> -> vector<16x64xf32>
    %cst_10 = arith.constant dense<0xFF800000> : vector<64xf32>
    %12 = vector.multi_reduction <maximumf>, %11, %cst_10 [0] : vector<16x64xf32> to vector<64xf32>
    %13 = vector.shape_cast %12 : vector<64xf32> to vector<1x64xf32>
    %14 = vector.broadcast %13 : vector<1x64xf32> to vector<16x64xf32>
    %15 = arith.subf %11, %14 : vector<16x64xf32>
    %16 = math.exp %15 : vector<16x64xf32>
    %cst_11 = arith.constant dense<0.000000e+00> : vector<64xf32>
    %17 = vector.multi_reduction <add>, %16, %cst_11 [0] : vector<16x64xf32> to vector<64xf32>
    %18 = vector.shape_cast %17 : vector<64xf32> to vector<1x64xf32>
    %19 = tpu.reciprocal %18 : vector<1x64xf32> -> vector<1x64xf32>
    %c0_12 = arith.constant 0 : index
    %c0_13 = arith.constant 0 : index
    %20 = vector.load %arg13[%c0_12, %c0_13] : memref<4x16xf32, #tpu.memory_space<vmem>>, vector<4x16xf32>
    %cst_14 = arith.constant dense<0.000000e+00> : vector<4x64xf32>
    %21 = tpu.matmul %20, %16, %cst_14 {dimension_numbers = #tpu.dot_dimension_numbers<[1], [0], [0], [1], [0, 0, 1, 1], [], []>} : vector<4x16xf32>, vector<16x64xf32>, vector<4x64xf32> -> vector<4x64xf32>
    %c0_15 = arith.constant 0 : index
    %22 = memref.load %arg2[%c0_15] : memref<1xf32, #tpu.memory_space<smem>>
    %23 = vector.broadcast %22 : f32 to vector<1x64xf32>
    %24 = arith.mulf %23, %19 : vector<1x64xf32>
    %25 = vector.broadcast %24 : vector<1x64xf32> to vector<4x64xf32>
    %26 = arith.mulf %21, %25 : vector<4x64xf32>
    %27 = arith.addf %26, %4 : vector<4x64xf32>
    %c0_16 = arith.constant 0 : index
    %c0_17 = arith.constant 0 : index
    %c0_18 = arith.constant 0 : index
    %28 = vector.load %arg11[%c0_16, %c0_17, %c0_18] : memref<1x4x64xf32, #tpu.memory_space<vmem>>, vector<1x4x64xf32>
    %29 = vector.shape_cast %28 : vector<1x4x64xf32> to vector<4x64xf32>
    %30 = vector.shape_cast %27 : vector<4x64xf32> to vector<1x4x64xf32>
    tpu.vector_store %arg11[%c0_16, %c0_17, %c0_18], %30 {strides = array<i32>} : memref<1x4x64xf32, #tpu.memory_space<vmem>>, vector<1x4x64xf32>,
    return
  }
  func.func @transform_0(%arg0: i32, %arg1: i32) -> i32 {
    %c0_i32 = arith.constant 0 : i32
    %c0_i32_0 = arith.constant 0 : i32
    return %c0_i32 : i32
  }
  func.func @transform_1(%arg0: i32, %arg1: i32) -> (i32, i32, i32) {
    %c0_i32 = arith.constant 0 : i32
    %c0_i32_0 = arith.constant 0 : i32
    return %arg0, %c0_i32, %arg1 : i32, i32, i32
  }
  func.func @transform_2(%arg0: i32, %arg1: i32) -> (i32, i32, i32) {
    %c0_i32 = arith.constant 0 : i32
    %c0_i32_0 = arith.constant 0 : i32
    %c0_i32_1 = arith.constant 0 : i32
    return %arg0, %c0_i32, %c0_i32_0 : i32, i32, i32
  }
  func.func @transform_3(%arg0: i32, %arg1: i32) -> (i32, i32) {
    %c0_i32 = arith.constant 0 : i32
    %c0_i32_0 = arith.constant 0 : i32
    %c0_i32_1 = arith.constant 0 : i32
    return %c0_i32, %c0_i32_0 : i32, i32
  }
  func.func @transform_4(%arg0: i32, %arg1: i32) -> (i32, i32) {
    %c0_i32 = arith.constant 0 : i32
    %c0_i32_0 = arith.constant 0 : i32
    %c0_i32_1 = arith.constant 0 : i32
    return %c0_i32, %c0_i32_0 : i32, i32
  }
  func.func @transform_5(%arg0: i32, %arg1: i32) -> (i32, i32) {
    %c0_i32 = arith.constant 0 : i32
    %c0_i32_0 = arith.constant 0 : i32
    %c0_i32_1 = arith.constant 0 : i32
    return %c0_i32, %c0_i32_0 : i32, i32
  }
  func.func @transform_6(%arg0: i32, %arg1: i32) -> (i32, i32) {
    %c0_i32 = arith.constant 0 : i32
    %c0_i32_0 = arith.constant 0 : i32
    %c0_i32_1 = arith.constant 0 : i32
    return %c0_i32, %c0_i32_0 : i32, i32
  }
  func.func @transform_7(%arg0: i32, %arg1: i32) -> (i32, i32) {
    %c0_i32 = arith.constant 0 : i32
    %c0_i32_0 = arith.constant 0 : i32
    %c0_i32_1 = arith.constant 0 : i32
    return %c0_i32, %c0_i32_0 : i32, i32
  }
  func.func @transform_8(%arg0: i32, %arg1: i32) -> (i32, i32) {
    %c0_i32 = arith.constant 0 : i32
    %c0_i32_0 = arith.constant 0 : i32
    %c0_i32_1 = arith.constant 0 : i32
    return %c0_i32, %c0_i32_0 : i32, i32
  }
  func.func @transform_9(%arg0: i32, %arg1: i32) -> (i32, i32, i32) {
    %c0_i32 = arith.constant 0 : i32
    %c0_i32_0 = arith.constant 0 : i32
    return %arg0, %c0_i32, %arg1 : i32, i32, i32
  }
}

</mosaic_0001>

<llo_original>
// kernel: tpu_custom_call.1
$region0: #{tpu_custom_call.1}
  #allocation0 [shape = 'u32[]', space=smem, size = 0x4, offset = 0x4, fixed_abs, tag = 'smem constant byte address 0x4 - core index']
  #allocation1 [shape = 'u32[144,128]{1,0:T(1,128)}', space=vmem, size = 0x12000, scoped, tag = 'internal scratch']
  #allocation2 [shape = 'f32[16,4]{1,0:T(8,128)}', space=vmem, size = 0x2000, scoped, tag = 'scratch operand']
  #allocation3 [shape = 'f32[4,16]{1,0:T(4,128)}', space=vmem, size = 0x800, scoped, tag = 'scratch operand']
  #allocation4 [shape = 'f32[1]{0:T(128)S(6)}', space=smem, size = 0x200, scoped, tag = 'scoped memory for tpu_custom_call.1']
  %s0 = inlined_call_operand.<no memory space> [shape: f32[1], index: 0, kind: input, shape index: {}]
  %s1 = inlined_call_operand.vmem [shape: f32[2,4,64], index: 1, kind: input, shape index: {}]
  %s2 = inlined_call_operand.vmem [shape: f32[2,6,16], index: 2, kind: input, shape index: {}]
  %s3 = inlined_call_operand.vmem [shape: f32[4,4], index: 3, kind: input, shape index: {}]
  %s4 = inlined_call_operand.vmem [shape: f32[4,1], index: 4, kind: input, shape index: {}]
  %s5 = inlined_call_operand.vmem [shape: f32[4,6], index: 5, kind: input, shape index: {}]
  %s6 = inlined_call_operand.vmem [shape: f32[4,1], index: 6, kind: input, shape index: {}]
  %s7 = inlined_call_operand.vmem [shape: f32[4,6], index: 7, kind: input, shape index: {}]
  %s8 = inlined_call_operand.vmem [shape: f32[4,1], index: 8, kind: input, shape index: {}]
  %s9 = inlined_call_operand.hbm [shape: f32[2,4,64], index: 9, kind: output, shape index: {}]
  %s10 = sld [smem:[#allocation0]]
  $region73: #{tpu_custom_call.1} parent=0
    _
  %s12 = ssub.s32 1, %s10
  %s13 = scalar_select 0, %s12, %s10
  %14 = sst [smem:[#allocation4]] %s0
  $region1: #{tpu_custom_call.1} parent=0
    #allocation5 [shape = 'u8[4096]{0}', space=vmem, size = 0x1000, scoped, tag = 'output window, operand 0']
    #allocation6 [shape = 's32[2]{0}', space=sflag, size = 0x8, scoped, tag = 'scoped memory for tpu_custom_call.1']
    %15 = vsyncpa [#allocation6], 0
    %s16 = scalar_lea.sflag [#allocation6], 1
    %17 = vsyncpa %s16, 0
    loop: start=0, step=1, limit=4
    $region2: #{tpu_custom_call.1} parent=1 // loop_pre_header
      _
    $region3: #{tpu_custom_call.1} parent=1 // loop_header
      %s19 = sphi 0, %s23
      %p20 = scmp.ge.s32.totalorder %s19, 4
      %s26 = sphi 0, %s38
      %s27 = sphi 0, %s34
      %s28 = sphi 0, %s26
      %s29 = sphi 0, %s27
      %s30 = sphi 0, %s28
      %s31 = sphi 0, %s29
      %s39 = sphi 0, %s39
      %s41 = sphi 0, %s39
      %s42 = sphi 0, %s41
      %s56 = sphi 0, %s42
      %s64 = sphi 0, %s66
      %s67 = sphi 0, %s64
      %s68 = sphi 0, %s67
      %s84 = sphi 0, %s68
      %s90 = sphi 0, %s92
      %s93 = sphi 0, %s90
      %s94 = sphi 0, %s93
      %s110 = sphi 0, %s94
      %s114 = sphi 0, %s114
      %s116 = sphi 0, %s114
      %s117 = sphi 0, %s116
      %s131 = sphi 0, %s117
      %s135 = sphi 0, %s135
      %s137 = sphi 0, %s135
      %s138 = sphi 0, %s137
      %s152 = sphi 0, %s138
      %s156 = sphi 0, %s156
      %s158 = sphi 0, %s156
      %s159 = sphi 0, %s158
      %s173 = sphi 0, %s159
      %s177 = sphi 0, %s177
      %s179 = sphi 0, %s177
      %s180 = sphi 0, %s179
      %s194 = sphi 0, %s180
      %s198 = sphi 0, %s198
      %s200 = sphi 0, %s198
      %s201 = sphi 0, %s200
      %s215 = sphi 0, %s201
      %s219 = sphi 0, %s219
      %s221 = sphi 0, %s219
      %s222 = sphi 0, %s221
      %s236 = sphi 0, %s222
      %s244 = sphi 0, %s246
      %s247 = sphi 0, %s244
      %s248 = sphi 0, %s247
      %s264 = sphi 0, %s248
    $region4: #{tpu_custom_call.1} parent=1 // loop_header_branch
      %22 = sbr.rel (%p20) target = $region8
    $region5: #{tpu_custom_call.1} parent=1 // loop_body
      %s24 = ssub.s32 %s19, 1
      %s25 = ssub.s32 %s19, 2
      %s32 = sadd.s32 1, %s27
      %p33 = scmp.ge.s32.totalorder %s32, 1
      %s34 = scalar_select %p33, 0, %s32
      %s35 = sadd.s32 1, %s26
      %s36 = scalar_select %p33, %s35, %s26
      %p37 = scmp.ge.s32.totalorder %s36, 2
      %s38 = scalar_select %p37, 0, %s36
      %s40 = sadd.s32 %s39, 1
      %p43 = scmp.eq.s32.totalorder %s19, 1
      %p44 = scmp.ne.s32.totalorder %s39, %s41
      %p45 = scmp.eq.s32.totalorder %s19, 0
      %p46 = por %p44, %p45
      %p47 = scmp.ne.s32.totalorder %s39, %s41
      %p48 = scmp.eq.s32.totalorder %s24, 1
      %p49 = por %p47, %p48
      %p50 = scmp.ne.s32.totalorder %s41, %s42
      %p51 = scmp.eq.s32.totalorder %s24, 0
      %p52 = por %p50, %p51
      %p53 = scmp.ne.s32.totalorder %s41, %s42
      %p54 = scmp.eq.s32.totalorder %s25, 1
      %p55 = por %p53, %p54
      %p57 = scmp.ne.s32.totalorder %s42, %s56
      %p58 = scmp.eq.s32.totalorder %s25, 0
      %p59 = por %p57, %p58
      %s60 = ssub.s32 %s26, %s38
      %s61 = ssub.s32 %s27, %s34
      %s62 = sor.u32 %s60, %s61
      %p63 = scmp.eq.s32.totalorder %s62, 0
      %s65 = sadd.s32 %s64, 1
      %s66 = scalar_select %p63, %s64, %s65
      %p69 = pneg %p63
      %p70 = scmp.eq.s32.totalorder %s19, 1
      %p71 = por %p69, %p70
      %p72 = scmp.ne.s32.totalorder %s64, %s67
      %p73 = scmp.eq.s32.totalorder %s19, 0
      %p74 = por %p72, %p73
      %p75 = scmp.ne.s32.totalorder %s64, %s67
      %p76 = scmp.eq.s32.totalorder %s24, 1
      %p77 = por %p75, %p76
      %p78 = scmp.ne.s32.totalorder %s67, %s68
      %p79 = scmp.eq.s32.totalorder %s24, 0
      %p80 = por %p78, %p79
      %p81 = scmp.ne.s32.totalorder %s67, %s68
      %p82 = scmp.eq.s32.totalorder %s25, 1
      %p83 = por %p81, %p82
      %p85 = scmp.ne.s32.totalorder %s68, %s84
      %p86 = scmp.eq.s32.totalorder %s25, 0
      %p87 = por %p85, %p86
      %s88 = ssub.s32 %s26, %s38
      %p89 = scmp.eq.s32.totalorder %s88, 0
      %s91 = sadd.s32 %s90, 1
      %s92 = scalar_select %p89, %s90, %s91
      %p95 = pneg %p89
      %p96 = scmp.eq.s32.totalorder %s19, 1
      %p97 = por %p95, %p96
      %p98 = scmp.ne.s32.totalorder %s90, %s93
      %p99 = scmp.eq.s32.totalorder %s19, 0
      %p100 = por %p98, %p99
      %p101 = scmp.ne.s32.totalorder %s90, %s93
      %p102 = scmp.eq.s32.totalorder %s24, 1
      %p103 = por %p101, %p102
      %p104 = scmp.ne.s32.totalorder %s93, %s94
      %p105 = scmp.eq.s32.totalorder %s24, 0
      %p106 = por %p104, %p105
      %p107 = scmp.ne.s32.totalorder %s93, %s94
      %p108 = scmp.eq.s32.totalorder %s25, 1
      %p109 = por %p107, %p108
      %p111 = scmp.ne.s32.totalorder %s94, %s110
      %p112 = scmp.eq.s32.totalorder %s25, 0
      %p113 = por %p111, %p112
      %s115 = sadd.s32 %s114, 1
      %p118 = scmp.eq.s32.totalorder %s19, 1
      %p119 = scmp.ne.s32.totalorder %s114, %s116
      %p120 = scmp.eq.s32.totalorder %s19, 0
      %p121 = por %p119, %p120
      %p122 = scmp.ne.s32.totalorder %s114, %s116
      %p123 = scmp.eq.s32.totalorder %s24, 1
      %p124 = por %p122, %p123
      %p125 = scmp.ne.s32.totalorder %s116, %s117
      %p126 = scmp.eq.s32.totalorder %s24, 0
      %p127 = por %p125, %p126
      %p128 = scmp.ne.s32.totalorder %s116, %s117
      %p129 = scmp.eq.s32.totalorder %s25, 1
      %p130 = por %p128, %p129
      %p132 = scmp.ne.s32.totalorder %s117, %s131
      %p133 = scmp.eq.s32.totalorder %s25, 0
      %p134 = por %p132, %p133
      %s136 = sadd.s32 %s135, 1
      %p139 = scmp.eq.s32.totalorder %s19, 1
      %p140 = scmp.ne.s32.totalorder %s135, %s137
      %p141 = scmp.eq.s32.totalorder %s19, 0
      %p142 = por %p140, %p141
      %p143 = scmp.ne.s32.totalorder %s135, %s137
      %p144 = scmp.eq.s32.totalorder %s24, 1
      %p145 = por %p143, %p144
      %p146 = scmp.ne.s32.totalorder %s137, %s138
      %p147 = scmp.eq.s32.totalorder %s24, 0
      %p148 = por %p146, %p147
      %p149 = scmp.ne.s32.totalorder %s137, %s138
      %p150 = scmp.eq.s32.totalorder %s25, 1
      %p151 = por %p149, %p150
      %p153 = scmp.ne.s32.totalorder %s138, %s152
      %p154 = scmp.eq.s32.totalorder %s25, 0
      %p155 = por %p153, %p154
      %s157 = sadd.s32 %s156, 1
      %p160 = scmp.eq.s32.totalorder %s19, 1
      %p161 = scmp.ne.s32.totalorder %s156, %s158
      %p162 = scmp.eq.s32.totalorder %s19, 0
      %p163 = por %p161, %p162
      %p164 = scmp.ne.s32.totalorder %s156, %s158
      %p165 = scmp.eq.s32.totalorder %s24, 1
      %p166 = por %p164, %p165
      %p167 = scmp.ne.s32.totalorder %s158, %s159
      %p168 = scmp.eq.s32.totalorder %s24, 0
      %p169 = por %p167, %p168
      %p170 = scmp.ne.s32.totalorder %s158, %s159
      %p171 = scmp.eq.s32.totalorder %s25, 1
      %p172 = por %p170, %p171
      %p174 = scmp.ne.s32.totalorder %s159, %s173
      %p175 = scmp.eq.s32.totalorder %s25, 0
      %p176 = por %p174, %p175
      %s178 = sadd.s32 %s177, 1
      %p181 = scmp.eq.s32.totalorder %s19, 1
      %p182 = scmp.ne.s32.totalorder %s177, %s179
      %p183 = scmp.eq.s32.totalorder %s19, 0
      %p184 = por %p182, %p183
      %p185 = scmp.ne.s32.totalorder %s177, %s179
      %p186 = scmp.eq.s32.totalorder %s24, 1
      %p187 = por %p185, %p186
      %p188 = scmp.ne.s32.totalorder %s179, %s180
      %p189 = scmp.eq.s32.totalorder %s24, 0
      %p190 = por %p188, %p189
      %p191 = scmp.ne.s32.totalorder %s179, %s180
      %p192 = scmp.eq.s32.totalorder %s25, 1
      %p193 = por %p191, %p192
      %p195 = scmp.ne.s32.totalorder %s180, %s194
      %p196 = scmp.eq.s32.totalorder %s25, 0
      %p197 = por %p195, %p196
      %s199 = sadd.s32 %s198, 1
      %p202 = scmp.eq.s32.totalorder %s19, 1
      %p203 = scmp.ne.s32.totalorder %s198, %s200
      %p204 = scmp.eq.s32.totalorder %s19, 0
      %p205 = por %p203, %p204
      %p206 = scmp.ne.s32.totalorder %s198, %s200
      %p207 = scmp.eq.s32.totalorder %s24, 1
      %p208 = por %p206, %p207
      %p209 = scmp.ne.s32.totalorder %s200, %s201
      %p210 = scmp.eq.s32.totalorder %s24, 0
      %p211 = por %p209, %p210
      %p212 = scmp.ne.s32.totalorder %s200, %s201
      %p213 = scmp.eq.s32.totalorder %s25, 1
      %p214 = por %p212, %p213
      %p216 = scmp.ne.s32.totalorder %s201, %s215
      %p217 = scmp.eq.s32.totalorder %s25, 0
      %p218 = por %p216, %p217
      %s220 = sadd.s32 %s219, 1
      %p223 = scmp.eq.s32.totalorder %s19, 1
      %p224 = scmp.ne.s32.totalorder %s219, %s221
      %p225 = scmp.eq.s32.totalorder %s19, 0
      %p226 = por %p224, %p225
      %p227 = scmp.ne.s32.totalorder %s219, %s221
      %p228 = scmp.eq.s32.totalorder %s24, 1
      %p229 = por %p227, %p228
      %p230 = scmp.ne.s32.totalorder %s221, %s222
      %p231 = scmp.eq.s32.totalorder %s24, 0
      %p232 = por %p230, %p231
      %p233 = scmp.ne.s32.totalorder %s221, %s222
      %p234 = scmp.eq.s32.totalorder %s25, 1
      %p235 = por %p233, %p234
      %p237 = scmp.ne.s32.totalorder %s222, %s236
      %p238 = scmp.eq.s32.totalorder %s25, 0
      %p239 = por %p237, %p238
      %s240 = ssub.s32 %s26, %s38
      %s241 = ssub.s32 %s27, %s34
      %s242 = sor.u32 %s240, %s241
      %p243 = scmp.eq.s32.totalorder %s242, 0
      %s245 = sadd.s32 %s244, 1
      %s246 = scalar_select %p243, %s244, %s245
      %p249 = pneg %p243
      %p250 = scmp.eq.s32.totalorder %s19, 1
      %p251 = por %p249, %p250
      %p252 = scmp.ne.s32.totalorder %s244, %s247
      %p253 = scmp.eq.s32.totalorder %s19, 0
      %p254 = por %p252, %p253
      %p255 = scmp.ne.s32.totalorder %s244, %s247
      %p256 = scmp.eq.s32.totalorder %s24, 1
      %p257 = por %p255, %p256
      %p258 = scmp.ne.s32.totalorder %s247, %s248
      %p259 = scmp.eq.s32.totalorder %s24, 0
      %p260 = por %p258, %p259
      %p261 = scmp.ne.s32.totalorder %s247, %s248
      %p262 = scmp.eq.s32.totalorder %s25, 1
      %p263 = por %p261, %p262
      %p265 = scmp.ne.s32.totalorder %s248, %s264
      %p266 = scmp.eq.s32.totalorder %s25, 0
      %p267 = por %p265, %p266
      %p268 = scmp.le.s32.totalorder 1, %s19
      %p269 = scmp.lt.s32.totalorder %s19, 3
      %p270 = pnand %p268, %p269
      %p271 = pneg %p270
      // Predicated region
      $region9: #{tpu_custom_call.1} parent=5 // pred_check
        _
      $region10: #{tpu_custom_call.1} parent=5 // pred_check_branch
        %273 = sbr.rel (%p270) target = $region12
      $region11: #{tpu_custom_call.1} parent=5 // pred_region
        %s274 = ssub.s32 %s19, 1
        // Predicated region
        $region13: #{tpu_custom_call.1} parent=11 // pred_check
          %p275 = pneg %p52
        $region14: #{tpu_custom_call.1} parent=11 // pred_check_branch
          %277 = sbr.rel (%p275) target = $region16
        $region15: #{tpu_custom_call.1} parent=11 // pred_region
          _
        $region16: #{tpu_custom_call.1} parent=11 // pred_fallthru
          _
        // Predicated region
        $region17: #{tpu_custom_call.1} parent=11 // pred_check
          %p278 = pneg %p106
        $region18: #{tpu_custom_call.1} parent=11 // pred_check_branch
          %280 = sbr.rel (%p278) target = $region20
        $region19: #{tpu_custom_call.1} parent=11 // pred_region
          %p281 = scmp.lt.s32.totalorder %s28, 1
          %s282 = scalar_select %p281, %s28, 1
          %s283 = smul.addr %s282, 8
          %s284 = scalar_lea.vmem %s2, %s283
        $region20: #{tpu_custom_call.1} parent=11 // pred_fallthru
          _
        // Predicated region
        $region21: #{tpu_custom_call.1} parent=11 // pred_check
          %p285 = pneg %p127
        $region22: #{tpu_custom_call.1} parent=11 // pred_check_branch
          %287 = sbr.rel (%p285) target = $region24
        $region23: #{tpu_custom_call.1} parent=11 // pred_region
          _
        $region24: #{tpu_custom_call.1} parent=11 // pred_fallthru
          _
        // Predicated region
        $region25: #{tpu_custom_call.1} parent=11 // pred_check
          %p288 = pneg %p148
        $region26: #{tpu_custom_call.1} parent=11 // pred_check_branch
          %290 = sbr.rel (%p288) target = $region28
        $region27: #{tpu_custom_call.1} parent=11 // pred_region
          _
        $region28: #{tpu_custom_call.1} parent=11 // pred_fallthru
          _
        // Predicated region
        $region29: #{tpu_custom_call.1} parent=11 // pred_check
          %p291 = pneg %p169
        $region30: #{tpu_custom_call.1} parent=11 // pred_check_branch
          %293 = sbr.rel (%p291) target = $region32
        $region31: #{tpu_custom_call.1} parent=11 // pred_region
          _
        $region32: #{tpu_custom_call.1} parent=11 // pred_fallthru
          _
        // Predicated region
        $region33: #{tpu_custom_call.1} parent=11 // pred_check
          %p294 = pneg %p190
        $region34: #{tpu_custom_call.1} parent=11 // pred_check_branch
          %296 = sbr.rel (%p294) target = $region36
        $region35: #{tpu_custom_call.1} parent=11 // pred_region
          _
        $region36: #{tpu_custom_call.1} parent=11 // pred_fallthru
          _
        // Predicated region
        $region37: #{tpu_custom_call.1} parent=11 // pred_check
          %p297 = pneg %p211
        $region38: #{tpu_custom_call.1} parent=11 // pred_check_branch
          %299 = sbr.rel (%p297) target = $region40
        $region39: #{tpu_custom_call.1} parent=11 // pred_region
          _
        $region40: #{tpu_custom_call.1} parent=11 // pred_fallthru
          _
        // Predicated region
        $region41: #{tpu_custom_call.1} parent=11 // pred_check
          %p300 = pneg %p232
        $region42: #{tpu_custom_call.1} parent=11 // pred_check_branch
          %302 = sbr.rel (%p300) target = $region44
        $region43: #{tpu_custom_call.1} parent=11 // pred_region
          _
        $region44: #{tpu_custom_call.1} parent=11 // pred_fallthru
          _
      $region12: #{tpu_custom_call.1} parent=5 // pred_fallthru
        _
      %p303 = scmp.lt.s32.totalorder %s19, 2
      // Predicated region
      $region45: #{tpu_custom_call.1} parent=5 // pred_check
        %p304 = pneg %p303
      $region46: #{tpu_custom_call.1} parent=5 // pred_check_branch
        %306 = sbr.rel (%p304) target = $region48
      $region47: #{tpu_custom_call.1} parent=5 // pred_region
        // Predicated region
        $region49: #{tpu_custom_call.1} parent=47 // pred_check
          %p307 = pneg %p74
        $region50: #{tpu_custom_call.1} parent=47 // pred_check_branch
          %309 = sbr.rel (%p307) target = $region52
        $region51: #{tpu_custom_call.1} parent=47 // pred_region
          %p310 = scmp.lt.s32.totalorder %s26, 1
          %s311 = scalar_select %p310, %s26, 1
          %p312 = scmp.lt.s32.totalorder %s27, 0
          %s313 = scalar_select %p312, %s27, 0
          %s314 = sadd.s32 %s313, %s311
          %s315 = smul.addr %s314, 4
          %s316 = scalar_lea.vmem %s1, %s315
        $region52: #{tpu_custom_call.1} parent=47 // pred_fallthru
          _
      $region48: #{tpu_custom_call.1} parent=5 // pred_fallthru
        _
      %p317 = scmp.le.s32.totalorder 1, %s19
      %p318 = scmp.lt.s32.totalorder %s19, 3
      %p319 = pnand %p317, %p318
      %p320 = pneg %p319
      // Predicated region
      $region53: #{tpu_custom_call.1} parent=5 // pred_check
        _
      $region54: #{tpu_custom_call.1} parent=5 // pred_check_branch
        %322 = sbr.rel (%p319) target = $region56
      $region55: #{tpu_custom_call.1} parent=5 // pred_region
        %s323 = ssub.s32 %s19, 1
        %p324 = pneg %p52
        %p325 = pneg %p49
        %p326 = scmp.lt.s32.totalorder %s28, 1
        %s327 = scalar_select %p326, %s28, 1
        %p328 = scmp.lt.s32.totalorder %s29, 0
        %s329 = scalar_select %p328, %s29, 0
        %s330 = sadd.s32 %s329, %s327
        %s331 = smul.addr %s330, 4
        %s332 = scalar_lea.vmem %s1, %s331
        %p333 = pneg %p80
        %p334 = pneg %p77
        %p335 = scmp.lt.s32.totalorder %s28, 1
        %s336 = scalar_select %p335, %s28, 1
        %s337 = smul.addr %s336, 8
        %s338 = scalar_lea.vmem %s2, %s337
        %p339 = pneg %p106
        %p340 = pneg %p103
        %p341 = pneg %p127
        %p342 = pneg %p124
        %p343 = pneg %p148
        %p344 = pneg %p145
        %p345 = pneg %p169
        %p346 = pneg %p166
        %p347 = pneg %p190
        %p348 = pneg %p187
        %p349 = pneg %p211
        %p350 = pneg %p208
        %p351 = pneg %p232
        %p352 = pneg %p229
        %p353 = pneg %p260
        %p354 = pneg %p257
        %s355 = sand.u32 %s247, 1
        %s356 = scalar_lea.sflag [#allocation6], %s355
        %s357 = sand.u32 %s247, 1
        %s358 = smul.addr %s357, 4
        %s359 = scalar_lea.vmem [#allocation5], %s358
        %p360 = scmp.lt.s32.totalorder %s28, 1
        %s361 = scalar_select %p360, %s28, 1
        %p362 = scmp.lt.s32.totalorder %s29, 0
        %s363 = scalar_select %p362, %s29, 0
        %s364 = sadd.s32 %s363, %s361
        %s365 = smul.addr %s364, 4
        %s366 = scalar_lea.vmem %s1, %s365
        %p367 = scmp.lt.s32.totalorder %s28, 1
        %s368 = scalar_select %p367, %s28, 1
        %s369 = smul.addr %s368, 8
        %s370 = scalar_lea.vmem %s2, %s369
        %p371 = scmp.eq.s32.totalorder %s29, 0
        // Predicated region
        $region57: #{tpu_custom_call.1} parent=55 // pred_check
          %p372 = pneg %p371
        $region58: #{tpu_custom_call.1} parent=55 // pred_check_branch
          %374 = sbr.rel (%p372) target = $region60
        $region59: #{tpu_custom_call.1} parent=55 // pred_region
          %v375 = vld [vmem:[%s370] sm:$0x3f]
          %v376 = vld [vmem:[%s5] sm:$0xf]
          %v377 = vld [vmem:[%s6] sm:$0xf]
          %379 = vset.pattern.permute.xlu0 0
          %380 = vperm.xlu0 %379, %v377
          %v381 = vpop.permute.xlu0 %380
          %vm383 = vcmask 48128
          %v385 = vsel %vm383, %v376, 0
          %vm387 = vcmask 1045504
          %v389 = vsel %vm387, %v375, 0
          %391 = vmatprep.subr.mxu0 0.0
          %392 = vmatpush1.msra.mxu0 0.0
          %393 = vmatprep.subr.mxu0 0.0
          %394 = vmatpush1.msra.mxu0 0.0
          %395 = vmatprep.subr.mxu0 0.0
          %396 = vmatpush1.msra.mxu0 0.0
          %397 = vmatprep.subr.mxu0 0.0
          %398 = vmatpush1.msra.mxu0 0.0
          %399 = vmatprep.subr.mxu0 0.0
          %400 = vmatpush1.msra.mxu0 0.0
          %401 = vmatprep.subr.mxu0 0.0
          %402 = vmatpush1.msra.mxu0 0.0
          %403 = vmatprep.subr.mxu0 0.0
          %404 = vmatpush1.msra.mxu0 0.0
          %405 = vmatprep.subr.mxu0 0.0
          %406 = vmatpush1.msra.mxu0 0.0
          %407 = vmatprep.subr.mxu0 0.0
          %408 = vmatpush1.msra.mxu0 0.0
          %409 = vmatprep.subr.mxu0 0.0
          %410 = vmatpush1.msra.mxu0 0.0
          %411 = vmatprep.subr.mxu0 0.0
          %412 = vmatpush1.msra.mxu0 0.0
          %413 = vmatprep.subr.mxu0 0.0
          %414 = vmatpush1.msra.mxu0 0.0
          %415 = vmatprep.subr.mxu0 0.0
          %416 = vmatpush1.msra.mxu0 0.0
          %417 = vmatprep.subr.mxu0 0.0
          %418 = vmatpush1.msra.mxu0 0.0
          %419 = vmatprep.subr.mxu0 0.0
          %420 = vmatpush1.msra.mxu0 0.0
          %421 = vmatprep.subr.mxu0 0.0
          %422 = vmatpush1.msra.mxu0 %v389
          %423 = vmatprep.subr.mxu0 0.0
          %424 = vmatpush2.msra.mxu0 0.0
          %425 = vmatprep.subr.mxu0 0.0
          %426 = vmatpush2.msra.mxu0 0.0
          %427 = vmatprep.subr.mxu0 0.0
          %428 = vmatpush2.msra.mxu0 0.0
          %429 = vmatprep.subr.mxu0 0.0
          %430 = vmatpush2.msra.mxu0 0.0
          %431 = vmatprep.subr.mxu0 0.0
          %432 = vmatpush2.msra.mxu0 0.0
          %433 = vmatprep.subr.mxu0 0.0
          %434 = vmatpush2.msra.mxu0 0.0
          %435 = vmatprep.subr.mxu0 0.0
          %436 = vmatpush2.msra.mxu0 0.0
          %437 = vmatprep.subr.mxu0 0.0
          %438 = vmatpush2.msra.mxu0 0.0
          %439 = vmatprep.subr.mxu0 0.0
          %440 = vmatpush2.msra.mxu0 0.0
          %441 = vmatprep.subr.mxu0 0.0
          %442 = vmatpush2.msra.mxu0 0.0
          %443 = vmatprep.subr.mxu0 0.0
          %444 = vmatpush2.msra.mxu0 0.0
          %445 = vmatprep.subr.mxu0 0.0
          %446 = vmatpush2.msra.mxu0 0.0
          %447 = vmatprep.subr.mxu0 0.0
          %448 = vmatpush2.msra.mxu0 0.0
          %449 = vmatprep.subr.mxu0 0.0
          %450 = vmatpush2.msra.mxu0 0.0
          %451 = vmatprep.subr.mxu0 0.0
          %452 = vmatpush2.msra.mxu0 0.0
          %453 = vmatprep.subr.mxu0 0.0
          %454 = vmatpush2.msra.mxu0 0.0
          %455 = vmatprep.mubr.f32.mxu0 0.0
          %456 = vmatmul.mubr.f32.gmra.mxu0 %v385
          %v457 = vpop.f32.mrf.mxu0
          %v458 = vadd.f32 %v381, %v457
          %v459 = vpop.f32.mrf.mxu0
          %460 = vdwg.mxu0
          %v461 = vld [vmem:[%s7] sm:$0xf]
          %v462 = vld [vmem:[%s8] sm:$0xf]
          %464 = vset.pattern.permute.xlu0 0
          %465 = vperm.xlu0 %464, %v462
          %v466 = vpop.permute.xlu0 %465
          %v469 = vsel %vm383, %v461, 0
          %471 = vmatprep.subr.mxu0 0.0
          %472 = vmatpush1.msra.mxu0 0.0
          %473 = vmatprep.subr.mxu0 0.0
          %474 = vmatpush1.msra.mxu0 0.0
          %475 = vmatprep.subr.mxu0 0.0
          %476 = vmatpush1.msra.mxu0 0.0
          %477 = vmatprep.subr.mxu0 0.0
          %478 = vmatpush1.msra.mxu0 0.0
          %479 = vmatprep.subr.mxu0 0.0
          %480 = vmatpush1.msra.mxu0 0.0
          %481 = vmatprep.subr.mxu0 0.0
          %482 = vmatpush1.msra.mxu0 0.0
          %483 = vmatprep.subr.mxu0 0.0
          %484 = vmatpush1.msra.mxu0 0.0
          %485 = vmatprep.subr.mxu0 0.0
          %486 = vmatpush1.msra.mxu0 0.0
          %487 = vmatprep.subr.mxu0 0.0
          %488 = vmatpush1.msra.mxu0 0.0
          %489 = vmatprep.subr.mxu0 0.0
          %490 = vmatpush1.msra.mxu0 0.0
          %491 = vmatprep.subr.mxu0 0.0
          %492 = vmatpush1.msra.mxu0 0.0
          %493 = vmatprep.subr.mxu0 0.0
          %494 = vmatpush1.msra.mxu0 0.0
          %495 = vmatprep.subr.mxu0 0.0
          %496 = vmatpush1.msra.mxu0 0.0
          %497 = vmatprep.subr.mxu0 0.0
          %498 = vmatpush1.msra.mxu0 0.0
          %499 = vmatprep.subr.mxu0 0.0
          %500 = vmatpush1.msra.mxu0 0.0
          %501 = vmatprep.subr.mxu0 0.0
          %502 = vmatpush1.msra.mxu0 %v389
          %503 = vmatprep.subr.mxu0 0.0
          %504 = vmatpush2.msra.mxu0 0.0
          %505 = vmatprep.subr.mxu0 0.0
          %506 = vmatpush2.msra.mxu0 0.0
          %507 = vmatprep.subr.mxu0 0.0
          %508 = vmatpush2.msra.mxu0 0.0
          %509 = vmatprep.subr.mxu0 0.0
          %510 = vmatpush2.msra.mxu0 0.0
          %511 = vmatprep.subr.mxu0 0.0
          %512 = vmatpush2.msra.mxu0 0.0
          %513 = vmatprep.subr.mxu0 0.0
          %514 = vmatpush2.msra.mxu0 0.0
          %515 = vmatprep.subr.mxu0 0.0
          %516 = vmatpush2.msra.mxu0 0.0
          %517 = vmatprep.subr.mxu0 0.0
          %518 = vmatpush2.msra.mxu0 0.0
          %519 = vmatprep.subr.mxu0 0.0
          %520 = vmatpush2.msra.mxu0 0.0
          %521 = vmatprep.subr.mxu0 0.0
          %522 = vmatpush2.msra.mxu0 0.0
          %523 = vmatprep.subr.mxu0 0.0
          %524 = vmatpush2.msra.mxu0 0.0
          %525 = vmatprep.subr.mxu0 0.0
          %526 = vmatpush2.msra.mxu0 0.0
          %527 = vmatprep.subr.mxu0 0.0
          %528 = vmatpush2.msra.mxu0 0.0
          %529 = vmatprep.subr.mxu0 0.0
          %530 = vmatpush2.msra.mxu0 0.0
          %531 = vmatprep.subr.mxu0 0.0
          %532 = vmatpush2.msra.mxu0 0.0
          %533 = vmatprep.subr.mxu0 0.0
          %534 = vmatpush2.msra.mxu0 0.0
          %535 = vmatprep.mubr.f32.mxu0 0.0
          %536 = vmatmul.mubr.f32.gmra.mxu0 %v469
          %v537 = vpop.f32.mrf.mxu0
          %v538 = vadd.f32 %v466, %v537
          %v539 = vpop.f32.mrf.mxu0
          %540 = vdwg.mxu0
          %541 = vxpose.xlu0.b32.start [1/16] %v458, 128
          %542 = vxpose.xlu0.b32.cont [2/16] 0.0, 128
          %543 = vxpose.xlu0.b32.cont [3/16] 0.0, 128
          %544 = vxpose.xlu0.b32.cont [4/16] 0.0, 128
          %545 = vxpose.xlu0.b32.cont [5/16] 0.0, 128
          %546 = vxpose.xlu0.b32.cont [6/16] 0.0, 128
          %547 = vxpose.xlu0.b32.cont [7/16] 0.0, 128
          %548 = vxpose.xlu0.b32.cont [8/16] 0.0, 128
          %549 = vxpose.xlu0.b32.cont [9/16] 0.0, 128
          %550 = vxpose.xlu0.b32.cont [10/16] 0.0, 128
          %551 = vxpose.xlu0.b32.cont [11/16] 0.0, 128
          %552 = vxpose.xlu0.b32.cont [12/16] 0.0, 128
          %553 = vxpose.xlu0.b32.cont [13/16] 0.0, 128
          %554 = vxpose.xlu0.b32.cont [14/16] 0.0, 128
          %555 = vxpose.xlu0.b32.cont [15/16] 0.0, 128
          %556 = vxpose.xlu0.b32.end [16/16] 0.0, 128
          %v557 = vpop.trf.xlu0
          %v558 = vpop.trf.xlu0
          %v559 = vpop.trf.xlu0
          %v560 = vpop.trf.xlu0
          %v561 = vpop.trf.xlu0
          %v562 = vpop.trf.xlu0
          %v563 = vpop.trf.xlu0
          %v564 = vpop.trf.xlu0
          %v565 = vpop.trf.xlu0
          %v566 = vpop.trf.xlu0
          %v567 = vpop.trf.xlu0
          %v568 = vpop.trf.xlu0
          %v569 = vpop.trf.xlu0
          %v570 = vpop.trf.xlu0
          %v571 = vpop.trf.xlu0
          %v572 = vpop.trf.xlu0
          %vm573 = vcmask 31744
          %574 = vst.msk [vmem:[#allocation2] sm:$0xff] %vm573, %v557
          %575 = vst.msk [vmem:[#allocation2 + $0x8] sm:$0xff] %vm573, %v558
          %vm576 = vcmask 125952
          %577 = vst.msk [vmem:[#allocation3] sm:$0xf] %vm576, %v538
        $region60: #{tpu_custom_call.1} parent=55 // pred_fallthru
          _
        %v578 = vld [vmem:[%s366] sm:$0xf]
        %v579 = vld [vmem:[%s3] sm:$0xf]
        %v580 = vld [vmem:[%s4] sm:$0xf]
        %582 = vset.pattern.permute.xlu0 0
        %583 = vperm.xlu0 %582, %v580
        %v584 = vpop.permute.xlu0 %583
        %vm586 = vcmask 31744
        %v588 = vsel %vm586, %v579, 0
        %vm590 = vcmask 1043456
        %v592 = vsel %vm590, %v578, 0
        %594 = vmatprep.subr.mxu0 0.0
        %595 = vmatpush1.msra.mxu0 0.0
        %596 = vmatprep.subr.mxu0 0.0
        %597 = vmatpush1.msra.mxu0 0.0
        %598 = vmatprep.subr.mxu0 0.0
        %599 = vmatpush1.msra.mxu0 0.0
        %600 = vmatprep.subr.mxu0 0.0
        %601 = vmatpush1.msra.mxu0 0.0
        %602 = vmatprep.subr.mxu0 0.0
        %603 = vmatpush1.msra.mxu0 0.0
        %604 = vmatprep.subr.mxu0 0.0
        %605 = vmatpush1.msra.mxu0 0.0
        %606 = vmatprep.subr.mxu0 0.0
        %607 = vmatpush1.msra.mxu0 0.0
        %608 = vmatprep.subr.mxu0 0.0
        %609 = vmatpush1.msra.mxu0 0.0
        %610 = vmatprep.subr.mxu0 0.0
        %611 = vmatpush1.msra.mxu0 0.0
        %612 = vmatprep.subr.mxu0 0.0
        %613 = vmatpush1.msra.mxu0 0.0
        %614 = vmatprep.subr.mxu0 0.0
        %615 = vmatpush1.msra.mxu0 0.0
        %616 = vmatprep.subr.mxu0 0.0
        %617 = vmatpush1.msra.mxu0 0.0
        %618 = vmatprep.subr.mxu0 0.0
        %619 = vmatpush1.msra.mxu0 0.0
        %620 = vmatprep.subr.mxu0 0.0
        %621 = vmatpush1.msra.mxu0 0.0
        %622 = vmatprep.subr.mxu0 0.0
        %623 = vmatpush1.msra.mxu0 0.0
        %624 = vmatprep.subr.mxu0 0.0
        %625 = vmatpush1.msra.mxu0 %v592
        %626 = vmatprep.subr.mxu0 0.0
        %627 = vmatpush2.msra.mxu0 0.0
        %628 = vmatprep.subr.mxu0 0.0
        %629 = vmatpush2.msra.mxu0 0.0
        %630 = vmatprep.subr.mxu0 0.0
        %631 = vmatpush2.msra.mxu0 0.0
        %632 = vmatprep.subr.mxu0 0.0
        %633 = vmatpush2.msra.mxu0 0.0
        %634 = vmatprep.subr.mxu0 0.0
        %635 = vmatpush2.msra.mxu0 0.0
        %636 = vmatprep.subr.mxu0 0.0
        %637 = vmatpush2.msra.mxu0 0.0
        %638 = vmatprep.subr.mxu0 0.0
        %639 = vmatpush2.msra.mxu0 0.0
        %640 = vmatprep.subr.mxu0 0.0
        %641 = vmatpush2.msra.mxu0 0.0
        %642 = vmatprep.subr.mxu0 0.0
        %643 = vmatpush2.msra.mxu0 0.0
        %644 = vmatprep.subr.mxu0 0.0
        %645 = vmatpush2.msra.mxu0 0.0
        %646 = vmatprep.subr.mxu0 0.0
        %647 = vmatpush2.msra.mxu0 0.0
        %648 = vmatprep.subr.mxu0 0.0
        %649 = vmatpush2.msra.mxu0 0.0
        %650 = vmatprep.subr.mxu0 0.0
        %651 = vmatpush2.msra.mxu0 0.0
        %652 = vmatprep.subr.mxu0 0.0
        %653 = vmatpush2.msra.mxu0 0.0
        %654 = vmatprep.subr.mxu0 0.0
        %655 = vmatpush2.msra.mxu0 0.0
        %656 = vmatprep.subr.mxu0 0.0
        %657 = vmatpush2.msra.mxu0 0.0
        %658 = vmatprep.mubr.f32.mxu0 0.0
        %659 = vmatmul.mubr.f32.gmra.mxu0 %v588
        %v660 = vpop.f32.mrf.mxu0
        %v661 = vadd.f32 %v584, %v660
        %v662 = vpop.f32.mrf.mxu0
        %663 = vdwg.mxu0
        %v664 = vld [vmem:[#allocation2] sm:$0xff]
        %v665 = vld [vmem:[#allocation2 + $0x8] sm:$0xff]
        %v667 = vsel %vm586, %v664, 0
        %v670 = vsel %vm586, %v665, 0
        %v673 = vsel %vm590, %v661, 0
        %675 = vmatprep.subr.mxu0 0.0
        %676 = vmatpush1.msra.mxu0 0.0
        %677 = vmatprep.subr.mxu0 0.0
        %678 = vmatpush1.msra.mxu0 0.0
        %679 = vmatprep.subr.mxu0 0.0
        %680 = vmatpush1.msra.mxu0 0.0
        %681 = vmatprep.subr.mxu0 0.0
        %682 = vmatpush1.msra.mxu0 0.0
        %683 = vmatprep.subr.mxu0 0.0
        %684 = vmatpush1.msra.mxu0 0.0
        %685 = vmatprep.subr.mxu0 0.0
        %686 = vmatpush1.msra.mxu0 0.0
        %687 = vmatprep.subr.mxu0 0.0
        %688 = vmatpush1.msra.mxu0 0.0
        %689 = vmatprep.subr.mxu0 0.0
        %690 = vmatpush1.msra.mxu0 0.0
        %691 = vmatprep.subr.mxu0 0.0
        %692 = vmatpush1.msra.mxu0 0.0
        %693 = vmatprep.subr.mxu0 0.0
        %694 = vmatpush1.msra.mxu0 0.0
        %695 = vmatprep.subr.mxu0 0.0
        %696 = vmatpush1.msra.mxu0 0.0
        %697 = vmatprep.subr.mxu0 0.0
        %698 = vmatpush1.msra.mxu0 0.0
        %699 = vmatprep.subr.mxu0 0.0
        %700 = vmatpush1.msra.mxu0 0.0
        %701 = vmatprep.subr.mxu0 0.0
        %702 = vmatpush1.msra.mxu0 0.0
        %703 = vmatprep.subr.mxu0 0.0
        %704 = vmatpush1.msra.mxu0 0.0
        %705 = vmatprep.subr.mxu0 0.0
        %706 = vmatpush1.msra.mxu0 %v673
        %707 = vmatprep.subr.mxu0 0.0
        %708 = vmatpush2.msra.mxu0 0.0
        %709 = vmatprep.subr.mxu0 0.0
        %710 = vmatpush2.msra.mxu0 0.0
        %711 = vmatprep.subr.mxu0 0.0
        %712 = vmatpush2.msra.mxu0 0.0
        %713 = vmatprep.subr.mxu0 0.0
        %714 = vmatpush2.msra.mxu0 0.0
        %715 = vmatprep.subr.mxu0 0.0
        %716 = vmatpush2.msra.mxu0 0.0
        %717 = vmatprep.subr.mxu0 0.0
        %718 = vmatpush2.msra.mxu0 0.0
        %719 = vmatprep.subr.mxu0 0.0
        %720 = vmatpush2.msra.mxu0 0.0
        %721 = vmatprep.subr.mxu0 0.0
        %722 = vmatpush2.msra.mxu0 0.0
        %723 = vmatprep.subr.mxu0 0.0
        %724 = vmatpush2.msra.mxu0 0.0
        %725 = vmatprep.subr.mxu0 0.0
        %726 = vmatpush2.msra.mxu0 0.0
        %727 = vmatprep.subr.mxu0 0.0
        %728 = vmatpush2.msra.mxu0 0.0
        %729 = vmatprep.subr.mxu0 0.0
        %730 = vmatpush2.msra.mxu0 0.0
        %731 = vmatprep.subr.mxu0 0.0
        %732 = vmatpush2.msra.mxu0 0.0
        %733 = vmatprep.subr.mxu0 0.0
        %734 = vmatpush2.msra.mxu0 0.0
        %735 = vmatprep.subr.mxu0 0.0
        %736 = vmatpush2.msra.mxu0 0.0
        %737 = vmatprep.subr.mxu0 0.0
        %738 = vmatpush2.msra.mxu0 0.0
        %739 = vmatprep.mubr.f32.mxu0 0.0
        %740 = vmatmul.mubr.f32.gmra.mxu0 %v667
        %v741 = vpop.f32.mrf.mxu0
        %v742 = vadd.f32 0.0, %v741
        %v743 = vpop.f32.mrf.mxu0
        %744 = vmatprep.mubr.f32.mxu0 0.0
        %745 = vmatmul.mubr.f32.gmra.mxu0 %v670
        %v746 = vpop.f32.mrf.mxu0
        %v747 = vadd.f32 0.0, %v746
        %v748 = vpop.f32.mrf.mxu0
        %749 = vdwg.mxu0
        %vm750 = vcmask 523264
        %v751 = vsel %vm750, %v742, -inf
        %v752 = vsel %vm750, %v747, -inf
        %v753 = vmax.f32 %v751, %v752
        %v754 = vrot.slane %v753, 4
        %v755 = vmax.f32 %v753, %v754
        %v756 = vrot.slane %v755, 2
        %v757 = vmax.f32 %v755, %v756
        %v758 = vrot.slane %v757, 1
        %v759 = vmax.f32 %v757, %v758
        %v760 = vsub.f32 %v742, %v759
        %v761 = vsub.f32 %v747, %v759
        %v762 = vmul.f32 %v760, 1.442695
        %v763 = vpow.pop %v762
        %v764 = vmul.f32 %v761, 1.442695
        %v765 = vpow.pop %v764
        %v766 = vsel %vm750, %v763, 0.0
        %v767 = vsel %vm750, %v765, 0.0
        %v768 = vadd.f32 %v766, %v767
        %v769 = vrot.slane %v768, 4
        %v770 = vadd.f32 %v768, %v769
        %v771 = vrot.slane %v770, 2
        %v772 = vadd.f32 %v770, %v771
        %v773 = vrot.slane %v772, 1
        %v774 = vadd.f32 %v772, %v773
        %v775 = vrcp.pop %v774
        %v776 = vld [vmem:[#allocation3] sm:$0xf]
        %vm777 = vcmask 130048
        %v779 = vsel %vm777, %v776, 0
        %781 = vmatprep.subr.mxu0 0.0
        %782 = vmatpush1.msra.mxu0 0.0
        %783 = vmatprep.subr.mxu0 0.0
        %784 = vmatpush1.msra.mxu0 0.0
        %785 = vmatprep.subr.mxu0 0.0
        %786 = vmatpush1.msra.mxu0 0.0
        %787 = vmatprep.subr.mxu0 0.0
        %788 = vmatpush1.msra.mxu0 0.0
        %789 = vmatprep.subr.mxu0 0.0
        %790 = vmatpush1.msra.mxu0 0.0
        %791 = vmatprep.subr.mxu0 0.0
        %792 = vmatpush1.msra.mxu0 0.0
        %793 = vmatprep.subr.mxu0 0.0
        %794 = vmatpush1.msra.mxu0 0.0
        %795 = vmatprep.subr.mxu0 0.0
        %796 = vmatpush1.msra.mxu0 0.0
        %797 = vmatprep.subr.mxu0 0.0
        %798 = vmatpush1.msra.mxu0 0.0
        %799 = vmatprep.subr.mxu0 0.0
        %800 = vmatpush1.msra.mxu0 0.0
        %801 = vmatprep.subr.mxu0 0.0
        %802 = vmatpush1.msra.mxu0 0.0
        %803 = vmatprep.subr.mxu0 0.0
        %804 = vmatpush1.msra.mxu0 0.0
        %805 = vmatprep.subr.mxu0 0.0
        %806 = vmatpush1.msra.mxu0 0.0
        %807 = vmatprep.subr.mxu0 0.0
        %808 = vmatpush1.msra.mxu0 0.0
        %809 = vmatprep.subr.mxu0 0.0
        %810 = vmatpush1.msra.mxu0 %v765
        %811 = vmatprep.subr.mxu0 0.0
        %812 = vmatpush1.msra.mxu0 %v763
        %813 = vmatprep.subr.mxu0 0.0
        %814 = vmatpush2.msra.mxu0 0.0
        %815 = vmatprep.subr.mxu0 0.0
        %816 = vmatpush2.msra.mxu0 0.0
        %817 = vmatprep.subr.mxu0 0.0
        %818 = vmatpush2.msra.mxu0 0.0
        %819 = vmatprep.subr.mxu0 0.0
        %820 = vmatpush2.msra.mxu0 0.0
        %821 = vmatprep.subr.mxu0 0.0
        %822 = vmatpush2.msra.mxu0 0.0
        %823 = vmatprep.subr.mxu0 0.0
        %824 = vmatpush2.msra.mxu0 0.0
        %825 = vmatprep.subr.mxu0 0.0
        %826 = vmatpush2.msra.mxu0 0.0
        %827 = vmatprep.subr.mxu0 0.0
        %828 = vmatpush2.msra.mxu0 0.0
        %829 = vmatprep.subr.mxu0 0.0
        %830 = vmatpush2.msra.mxu0 0.0
        %831 = vmatprep.subr.mxu0 0.0
        %832 = vmatpush2.msra.mxu0 0.0
        %833 = vmatprep.subr.mxu0 0.0
        %834 = vmatpush2.msra.mxu0 0.0
        %835 = vmatprep.subr.mxu0 0.0
        %836 = vmatpush2.msra.mxu0 0.0
        %837 = vmatprep.subr.mxu0 0.0
        %838 = vmatpush2.msra.mxu0 0.0
        %839 = vmatprep.subr.mxu0 0.0
        %840 = vmatpush2.msra.mxu0 0.0
        %841 = vmatprep.subr.mxu0 0.0
        %842 = vmatpush2.msra.mxu0 0.0
        %843 = vmatprep.subr.mxu0 0.0
        %844 = vmatpush2.msra.mxu0 0.0
        %845 = vmatprep.mubr.f32.mxu0 0.0
        %846 = vmatmul.mubr.f32.gmra.mxu0 %v779
        %v847 = vpop.f32.mrf.mxu0
        %v848 = vadd.f32 0.0, %v847
        %v849 = vpop.f32.mrf.mxu0
        %850 = vdwg.mxu0
        %s851 = sld [smem:[#allocation4]]
        %v852 = vstv %s851
        %v853 = vmul.f32 %v852, %v775
        %v854 = vmul.f32 %v848, %v853
        %v855 = vadd.f32 %v854, %v578
        %vm856 = vcmask 519168
        %857 = vst.msk [vmem:[%s359] sm:$0xf] %vm856, %v855
        %s858 = sand.u32 %s247, 1
        %s859 = scalar_lea.sflag [#allocation6], %s858
        %s860 = sand.u32 %s247, 1
        %s861 = smul.addr %s860, 4
        %s862 = scalar_lea.vmem [#allocation5], %s861
        // Predicated region
        $region61: #{tpu_custom_call.1} parent=55 // pred_check
          %p863 = pneg %p257
        $region62: #{tpu_custom_call.1} parent=55 // pred_check_branch
          %865 = sbr.rel (%p863) target = $region64
        $region63: #{tpu_custom_call.1} parent=55 // pred_region
          %s867 = ssub.s32 64, 64
          %868 = vsyncadd %s859, %s867
          %s869 = sadd.s32 %s29, %s28
          %s870 = smul.addr %s869, 64
          %s871 = scalar_lea.hbm %s9, %s870
          %s873 = sshll.u32 %s862, 4
          %s874 = int_to_ptr.vmem [resolvable:$true] %s873
          %876 = dma.vmem_to_hbm [thread:$0]  %s874, 64, %s871, %s859
        $region64: #{tpu_custom_call.1} parent=55 // pred_fallthru
          _
      $region56: #{tpu_custom_call.1} parent=5 // pred_fallthru
        _
      %p877 = scmp.le.s32.totalorder 2, %s19
      // Predicated region
      $region65: #{tpu_custom_call.1} parent=5 // pred_check
        %p878 = pneg %p877
      $region66: #{tpu_custom_call.1} parent=5 // pred_check_branch
        %880 = sbr.rel (%p878) target = $region68
      $region67: #{tpu_custom_call.1} parent=5 // pred_region
        %s881 = ssub.s32 %s19, 2
        // Predicated region
        $region69: #{tpu_custom_call.1} parent=67 // pred_check
          %p882 = pneg %p263
        $region70: #{tpu_custom_call.1} parent=67 // pred_check_branch
          %884 = sbr.rel (%p882) target = $region72
        $region71: #{tpu_custom_call.1} parent=67 // pred_region
          %s885 = sand.u32 %s248, 1
          %s886 = scalar_lea.sflag [#allocation6], %s885
          %s887 = sand.u32 %s248, 1
          %s888 = smul.addr %s887, 4
          %s889 = scalar_lea.vmem [#allocation5], %s888
          %890 = dma.done %s886, 64
        $region72: #{tpu_custom_call.1} parent=67 // pred_fallthru
          _
      $region68: #{tpu_custom_call.1} parent=5 // pred_fallthru
        _
    $region6: #{tpu_custom_call.1} parent=1 // loop_footer
      %s23 = sadd.s32 1, %s19
    $region7: #{tpu_custom_call.1} parent=1 // loop_footer_branch
      %18 = sbr.rel target = $region3
    $region8: #{tpu_custom_call.1} parent=1 // loop_exit
      _
    %891 = vsyncpa [#allocation6], 1
    %s892 = scalar_lea.sflag [#allocation6], 1
    %893 = vsyncpa %s892, 1

// kernel: tpu_custom_call.1
$region0: #{tpu_custom_call.1}
  #allocation0 [shape = 'u32[]', space=smem, size = 0x4, offset = 0x4, fixed_abs, tag = 'smem constant byte address 0x4 - core index']
  #allocation1 [shape = 'u32[144,128]{1,0:T(1,128)}', space=vmem, size = 0x12000, scoped, tag = 'internal scratch']
  #allocation2 [shape = 'f32[16,4]{1,0:T(8,128)}', space=vmem, size = 0x2000, scoped, tag = 'scratch operand']
  #allocation3 [shape = 'f32[4,16]{1,0:T(4,128)}', space=vmem, size = 0x800, scoped, tag = 'scratch operand']
  #allocation4 [shape = 'f32[1]{0:T(128)S(6)}', space=smem, size = 0x200, scoped, tag = 'scoped memory for tpu_custom_call.1']
  %s0 = inlined_call_operand.<no memory space> [shape: f32[1], index: 0, kind: input, shape index: {}]
  %s1 = inlined_call_operand.vmem [shape: f32[2,4,64], index: 1, kind: input, shape index: {}]
  %s2 = inlined_call_operand.vmem [shape: f32[2,6,16], index: 2, kind: input, shape index: {}]
  %s3 = inlined_call_operand.vmem [shape: f32[4,4], index: 3, kind: input, shape index: {}]
  %s4 = inlined_call_operand.vmem [shape: f32[4,1], index: 4, kind: input, shape index: {}]
  %s5 = inlined_call_operand.vmem [shape: f32[4,6], index: 5, kind: input, shape index: {}]
  %s6 = inlined_call_operand.vmem [shape: f32[4,1], index: 6, kind: input, shape index: {}]
  %s7 = inlined_call_operand.vmem [shape: f32[4,6], index: 7, kind: input, shape index: {}]
  %s8 = inlined_call_operand.vmem [shape: f32[4,1], index: 8, kind: input, shape index: {}]
  %s9 = inlined_call_operand.hbm [shape: f32[2,4,64], index: 9, kind: output, shape index: {}]
  %s10 = sld [smem:[#allocation0]]
  $region73: #{tpu_custom_call.1} parent=0
    _
  %s12 = ssub.s32 1, %s10
  %s13 = scalar_select 0, %s12, %s10
  %14 = sst [smem:[#allocation4]] %s0
  $region1: #{tpu_custom_call.1} parent=0
    #allocation5 [shape = 'u8[4096]{0}', space=vmem, size = 0x1000, scoped, tag = 'output window, operand 0']
    #allocation6 [shape = 's32[2]{0}', space=sflag, size = 0x8, scoped, tag = 'scoped memory for tpu_custom_call.1']
    %15 = vsyncpa [#allocation6], 0
    %s16 = scalar_lea.sflag [#allocation6], 1
    %17 = vsyncpa %s16, 0
    loop: start=0, step=1, limit=4
    $region2: #{tpu_custom_call.1} parent=1 // loop_pre_header
      _
    $region3: #{tpu_custom_call.1} parent=1 // loop_header
      %s19 = sphi 0, %s23
      %p20 = scmp.ge.s32.totalorder %s19, 4
      %s26 = sphi 0, %s38
      %s27 = sphi 0, %s34
      %s28 = sphi 0, %s26
      %s29 = sphi 0, %s27
      %s30 = sphi 0, %s28
      %s31 = sphi 0, %s29
      %s39 = sphi 0, %s39
      %s41 = sphi 0, %s39
      %s42 = sphi 0, %s41
      %s56 = sphi 0, %s42
      %s64 = sphi 0, %s66
      %s67 = sphi 0, %s64
      %s68 = sphi 0, %s67
      %s84 = sphi 0, %s68
      %s90 = sphi 0, %s92
      %s93 = sphi 0, %s90
      %s94 = sphi 0, %s93
      %s110 = sphi 0, %s94
      %s114 = sphi 0, %s114
      %s116 = sphi 0, %s114
      %s117 = sphi 0, %s116
      %s131 = sphi 0, %s117
      %s135 = sphi 0, %s135
      %s137 = sphi 0, %s135
      %s138 = sphi 0, %s137
      %s152 = sphi 0, %s138
      %s156 = sphi 0, %s156
      %s158 = sphi 0, %s156
      %s159 = sphi 0, %s158
      %s173 = sphi 0, %s159
      %s177 = sphi 0, %s177
      %s179 = sphi 0, %s177
      %s180 = sphi 0, %s179
      %s194 = sphi 0, %s180
      %s198 = sphi 0, %s198
      %s200 = sphi 0, %s198
      %s201 = sphi 0, %s200
      %s215 = sphi 0, %s201
      %s219 = sphi 0, %s219
      %s221 = sphi 0, %s219
      %s222 = sphi 0, %s221
      %s236 = sphi 0, %s222
      %s244 = sphi 0, %s246
      %s247 = sphi 0, %s244
      %s248 = sphi 0, %s247
      %s264 = sphi 0, %s248
    $region4: #{tpu_custom_call.1} parent=1 // loop_header_branch
      %22 = sbr.rel (%p20) target = $region8
    $region5: #{tpu_custom_call.1} parent=1 // loop_body
      %s24 = ssub.s32 %s19, 1
      %s25 = ssub.s32 %s19, 2
      %s32 = sadd.s32 1, %s27
      %p33 = scmp.ge.s32.totalorder %s32, 1
      %s34 = scalar_select %p33, 0, %s32
      %s35 = sadd.s32 1, %s26
      %s36 = scalar_select %p33, %s35, %s26
      %p37 = scmp.ge.s32.totalorder %s36, 2
      %s38 = scalar_select %p37, 0, %s36
      %s40 = sadd.s32 %s39, 1
      %p43 = scmp.eq.s32.totalorder %s19, 1
      %p44 = scmp.ne.s32.totalorder %s39, %s41
      %p45 = scmp.eq.s32.totalorder %s19, 0
      %p46 = por %p44, %p45
      %p47 = scmp.ne.s32.totalorder %s39, %s41
      %p48 = scmp.eq.s32.totalorder %s24, 1
      %p49 = por %p47, %p48
      %p50 = scmp.ne.s32.totalorder %s41, %s42
      %p51 = scmp.eq.s32.totalorder %s24, 0
      %p52 = por %p50, %p51
      %p53 = scmp.ne.s32.totalorder %s41, %s42
      %p54 = scmp.eq.s32.totalorder %s25, 1
      %p55 = por %p53, %p54
      %p57 = scmp.ne.s32.totalorder %s42, %s56
      %p58 = scmp.eq.s32.totalorder %s25, 0
      %p59 = por %p57, %p58
      %s60 = ssub.s32 %s26, %s38
      %s61 = ssub.s32 %s27, %s34
      %s62 = sor.u32 %s60, %s61
      %p63 = scmp.eq.s32.totalorder %s62, 0
      %s65 = sadd.s32 %s64, 1
      %s66 = scalar_select %p63, %s64, %s65
      %p69 = pneg %p63
      %p70 = scmp.eq.s32.totalorder %s19, 1
      %p71 = por %p69, %p70
      %p72 = scmp.ne.s32.totalorder %s64, %s67
      %p73 = scmp.eq.s32.totalorder %s19, 0
      %p74 = por %p72, %p73
      %p75 = scmp.ne.s32.totalorder %s64, %s67
      %p76 = scmp.eq.s32.totalorder %s24, 1
      %p77 = por %p75, %p76
      %p78 = scmp.ne.s32.totalorder %s67, %s68
      %p79 = scmp.eq.s32.totalorder %s24, 0
      %p80 = por %p78, %p79
      %p81 = scmp.ne.s32.totalorder %s67, %s68
      %p82 = scmp.eq.s32.totalorder %s25, 1
      %p83 = por %p81, %p82
      %p85 = scmp.ne.s32.totalorder %s68, %s84
      %p86 = scmp.eq.s32.totalorder %s25, 0
      %p87 = por %p85, %p86
      %s88 = ssub.s32 %s26, %s38
      %p89 = scmp.eq.s32.totalorder %s88, 0
      %s91 = sadd.s32 %s90, 1
      %s92 = scalar_select %p89, %s90, %s91
      %p95 = pneg %p89
      %p96 = scmp.eq.s32.totalorder %s19, 1
      %p97 = por %p95, %p96
      %p98 = scmp.ne.s32.totalorder %s90, %s93
      %p99 = scmp.eq.s32.totalorder %s19, 0
      %p100 = por %p98, %p99
      %p101 = scmp.ne.s32.totalorder %s90, %s93
      %p102 = scmp.eq.s32.totalorder %s24, 1
      %p103 = por %p101, %p102
      %p104 = scmp.ne.s32.totalorder %s93, %s94
      %p105 = scmp.eq.s32.totalorder %s24, 0
      %p106 = por %p104, %p105
      %p107 = scmp.ne.s32.totalorder %s93, %s94
      %p108 = scmp.eq.s32.totalorder %s25, 1
      %p109 = por %p107, %p108
      %p111 = scmp.ne.s32.totalorder %s94, %s110
      %p112 = scmp.eq.s32.totalorder %s25, 0
      %p113 = por %p111, %p112
      %s115 = sadd.s32 %s114, 1
      %p118 = scmp.eq.s32.totalorder %s19, 1
      %p119 = scmp.ne.s32.totalorder %s114, %s116
      %p120 = scmp.eq.s32.totalorder %s19, 0
      %p121 = por %p119, %p120
      %p122 = scmp.ne.s32.totalorder %s114, %s116
      %p123 = scmp.eq.s32.totalorder %s24, 1
      %p124 = por %p122, %p123
      %p125 = scmp.ne.s32.totalorder %s116, %s117
      %p126 = scmp.eq.s32.totalorder %s24, 0
      %p127 = por %p125, %p126
      %p128 = scmp.ne.s32.totalorder %s116, %s117
      %p129 = scmp.eq.s32.totalorder %s25, 1
      %p130 = por %p128, %p129
      %p132 = scmp.ne.s32.totalorder %s117, %s131
      %p133 = scmp.eq.s32.totalorder %s25, 0
      %p134 = por %p132, %p133
      %s136 = sadd.s32 %s135, 1
      %p139 = scmp.eq.s32.totalorder %s19, 1
      %p140 = scmp.ne.s32.totalorder %s135, %s137
      %p141 = scmp.eq.s32.totalorder %s19, 0
      %p142 = por %p140, %p141
      %p143 = scmp.ne.s32.totalorder %s135, %s137
      %p144 = scmp.eq.s32.totalorder %s24, 1
      %p145 = por %p143, %p144
      %p146 = scmp.ne.s32.totalorder %s137, %s138
      %p147 = scmp.eq.s32.totalorder %s24, 0
      %p148 = por %p146, %p147
      %p149 = scmp.ne.s32.totalorder %s137, %s138
      %p150 = scmp.eq.s32.totalorder %s25, 1
      %p151 = por %p149, %p150
      %p153 = scmp.ne.s32.totalorder %s138, %s152
      %p154 = scmp.eq.s32.totalorder %s25, 0
      %p155 = por %p153, %p154
      %s157 = sadd.s32 %s156, 1
      %p160 = scmp.eq.s32.totalorder %s19, 1
      %p161 = scmp.ne.s32.totalorder %s156, %s158
      %p162 = scmp.eq.s32.totalorder %s19, 0
      %p163 = por %p161, %p162
      %p164 = scmp.ne.s32.totalorder %s156, %s158
      %p165 = scmp.eq.s32.totalorder %s24, 1
      %p166 = por %p164, %p165
      %p167 = scmp.ne.s32.totalorder %s158, %s159
      %p168 = scmp.eq.s32.totalorder %s24, 0
      %p169 = por %p167, %p168
      %p170 = scmp.ne.s32.totalorder %s158, %s159
      %p171 = scmp.eq.s32.totalorder %s25, 1
      %p172 = por %p170, %p171
      %p174 = scmp.ne.s32.totalorder %s159, %s173
      %p175 = scmp.eq.s32.totalorder %s25, 0
      %p176 = por %p174, %p175
      %s178 = sadd.s32 %s177, 1
      %p181 = scmp.eq.s32.totalorder %s19, 1
      %p182 = scmp.ne.s32.totalorder %s177, %s179
      %p183 = scmp.eq.s32.totalorder %s19, 0
      %p184 = por %p182, %p183
      %p185 = scmp.ne.s32.totalorder %s177, %s179
      %p186 = scmp.eq.s32.totalorder %s24, 1
      %p187 = por %p185, %p186
      %p188 = scmp.ne.s32.totalorder %s179, %s180
      %p189 = scmp.eq.s32.totalorder %s24, 0
      %p190 = por %p188, %p189
      %p191 = scmp.ne.s32.totalorder %s179, %s180
      %p192 = scmp.eq.s32.totalorder %s25, 1
      %p193 = por %p191, %p192
      %p195 = scmp.ne.s32.totalorder %s180, %s194
      %p196 = scmp.eq.s32.totalorder %s25, 0
      %p197 = por %p195, %p196
      %s199 = sadd.s32 %s198, 1
      %p202 = scmp.eq.s32.totalorder %s19, 1
      %p203 = scmp.ne.s32.totalorder %s198, %s200
      %p204 = scmp.eq.s32.totalorder %s19, 0
      %p205 = por %p203, %p204
      %p206 = scmp.ne.s32.totalorder %s198, %s200
      %p207 = scmp.eq.s32.totalorder %s24, 1
      %p208 = por %p206, %p207
      %p209 = scmp.ne.s32.totalorder %s200, %s201
      %p210 = scmp.eq.s32.totalorder %s24, 0
      %p211 = por %p209, %p210
      %p212 = scmp.ne.s32.totalorder %s200, %s201
      %p213 = scmp.eq.s32.totalorder %s25, 1
      %p214 = por %p212, %p213
      %p216 = scmp.ne.s32.totalorder %s201, %s215
      %p217 = scmp.eq.s32.totalorder %s25, 0
      %p218 = por %p216, %p217
      %s220 = sadd.s32 %s219, 1
      %p223 = scmp.eq.s32.totalorder %s19, 1
      %p224 = scmp.ne.s32.totalorder %s219, %s221
      %p225 = scmp.eq.s32.totalorder %s19, 0
      %p226 = por %p224, %p225
      %p227 = scmp.ne.s32.totalorder %s219, %s221
      %p228 = scmp.eq.s32.totalorder %s24, 1
      %p229 = por %p227, %p228
      %p230 = scmp.ne.s32.totalorder %s221, %s222
      %p231 = scmp.eq.s32.totalorder %s24, 0
      %p232 = por %p230, %p231
      %p233 = scmp.ne.s32.totalorder %s221, %s222
      %p234 = scmp.eq.s32.totalorder %s25, 1
      %p235 = por %p233, %p234
      %p237 = scmp.ne.s32.totalorder %s222, %s236
      %p238 = scmp.eq.s32.totalorder %s25, 0
      %p239 = por %p237, %p238
      %s240 = ssub.s32 %s26, %s38
      %s241 = ssub.s32 %s27, %s34
      %s242 = sor.u32 %s240, %s241
      %p243 = scmp.eq.s32.totalorder %s242, 0
      %s245 = sadd.s32 %s244, 1
      %s246 = scalar_select %p243, %s244, %s245
      %p249 = pneg %p243
      %p250 = scmp.eq.s32.totalorder %s19, 1
      %p251 = por %p249, %p250
      %p252 = scmp.ne.s32.totalorder %s244, %s247
      %p253 = scmp.eq.s32.totalorder %s19, 0
      %p254 = por %p252, %p253
      %p255 = scmp.ne.s32.totalorder %s244, %s247
      %p256 = scmp.eq.s32.totalorder %s24, 1
      %p257 = por %p255, %p256
      %p258 = scmp.ne.s32.totalorder %s247, %s248
      %p259 = scmp.eq.s32.totalorder %s24, 0
      %p260 = por %p258, %p259
      %p261 = scmp.ne.s32.totalorder %s247, %s248
      %p262 = scmp.eq.s32.totalorder %s25, 1
      %p263 = por %p261, %p262
      %p265 = scmp.ne.s32.totalorder %s248, %s264
      %p266 = scmp.eq.s32.totalorder %s25, 0
      %p267 = por %p265, %p266
      %p268 = scmp.le.s32.totalorder 1, %s19
      %p269 = scmp.lt.s32.totalorder %s19, 3
      %p270 = pnand %p268, %p269
      %p271 = pneg %p270
      // Predicated region
      $region9: #{tpu_custom_call.1} parent=5 // pred_check
        _
      $region10: #{tpu_custom_call.1} parent=5 // pred_check_branch
        %273 = sbr.rel (%p270) target = $region12
      $region11: #{tpu_custom_call.1} parent=5 // pred_region
        %s274 = ssub.s32 %s19, 1
        // Predicated region
        $region13: #{tpu_custom_call.1} parent=11 // pred_check
          %p275 = pneg %p52
        $region14: #{tpu_custom_call.1} parent=11 // pred_check_branch
          %277 = sbr.rel (%p275) target = $region16
        $region15: #{tpu_custom_call.1} parent=11 // pred_region
          _
        $region16: #{tpu_custom_call.1} parent=11 // pred_fallthru
          _
        // Predicated region
        $region17: #{tpu_custom_call.1} parent=11 // pred_check
          %p278 = pneg %p127
        $region18: #{tpu_custom_call.1} parent=11 // pred_check_branch
          %280 = sbr.rel (%p278) target = $region20
        $region19: #{tpu_custom_call.1} parent=11 // pred_region
          _
        $region20: #{tpu_custom_call.1} parent=11 // pred_fallthru
          _
        // Predicated region
        $region21: #{tpu_custom_call.1} parent=11 // pred_check
          %p281 = pneg %p148
        $region22: #{tpu_custom_call.1} parent=11 // pred_check_branch
          %283 = sbr.rel (%p281) target = $region24
        $region23: #{tpu_custom_call.1} parent=11 // pred_region
          _
        $region24: #{tpu_custom_call.1} parent=11 // pred_fallthru
          _
        // Predicated region
        $region25: #{tpu_custom_call.1} parent=11 // pred_check
          %p284 = pneg %p169
        $region26: #{tpu_custom_call.1} parent=11 // pred_check_branch
          %286 = sbr.rel (%p284) target = $region28
        $region27: #{tpu_custom_call.1} parent=11 // pred_region
          _
        $region28: #{tpu_custom_call.1} parent=11 // pred_fallthru
          _
        // Predicated region
        $region29: #{tpu_custom_call.1} parent=11 // pred_check
          %p287 = pneg %p190
        $region30: #{tpu_custom_call.1} parent=11 // pred_check_branch
          %289 = sbr.rel (%p287) target = $region32
        $region31: #{tpu_custom_call.1} parent=11 // pred_region
          _
        $region32: #{tpu_custom_call.1} parent=11 // pred_fallthru
          _
        // Predicated region
        $region33: #{tpu_custom_call.1} parent=11 // pred_check
          %p290 = pneg %p211
        $region34: #{tpu_custom_call.1} parent=11 // pred_check_branch
          %292 = sbr.rel (%p290) target = $region36
        $region35: #{tpu_custom_call.1} parent=11 // pred_region
          _
        $region36: #{tpu_custom_call.1} parent=11 // pred_fallthru
          _
        // Predicated region
        $region37: #{tpu_custom_call.1} parent=11 // pred_check
          %p293 = pneg %p232
        $region38: #{tpu_custom_call.1} parent=11 // pred_check_branch
          %295 = sbr.rel (%p293) target = $region40
        $region39: #{tpu_custom_call.1} parent=11 // pred_region
          _
        $region40: #{tpu_custom_call.1} parent=11 // pred_fallthru
          _
      $region12: #{tpu_custom_call.1} parent=5 // pred_fallthru
        _
      %p296 = scmp.lt.s32.totalorder %s19, 2
      // Predicated region
      $region41: #{tpu_custom_call.1} parent=5 // pred_check
        %p297 = pneg %p296
      $region42: #{tpu_custom_call.1} parent=5 // pred_check_branch
        %299 = sbr.rel (%p297) target = $region44
      $region43: #{tpu_custom_call.1} parent=5 // pred_region
        // Predicated region
        $region45: #{tpu_custom_call.1} parent=43 // pred_check
          %p300 = pneg %p74
        $region46: #{tpu_custom_call.1} parent=43 // pred_check_branch
          %302 = sbr.rel (%p300) target = $region48
        $region47: #{tpu_custom_call.1} parent=43 // pred_region
          %p303 = scmp.lt.s32.totalorder %s26, 1
          %s304 = scalar_select %p303, %s26, 1
          %p305 = scmp.lt.s32.totalorder %s27, 0
          %s306 = scalar_select %p305, %s27, 0
          %s307 = sadd.s32 %s306, %s304
          %s308 = smul.addr %s307, 4
          %s309 = scalar_lea.vmem %s1, %s308
        $region48: #{tpu_custom_call.1} parent=43 // pred_fallthru
          _
        // Predicated region
        $region49: #{tpu_custom_call.1} parent=43 // pred_check
          %p310 = pneg %p100
        $region50: #{tpu_custom_call.1} parent=43 // pred_check_branch
          %312 = sbr.rel (%p310) target = $region52
        $region51: #{tpu_custom_call.1} parent=43 // pred_region
          %p313 = scmp.lt.s32.totalorder %s26, 1
          %s314 = scalar_select %p313, %s26, 1
          %s315 = smul.addr %s314, 8
          %s316 = scalar_lea.vmem %s2, %s315
        $region52: #{tpu_custom_call.1} parent=43 // pred_fallthru
          _
      $region44: #{tpu_custom_call.1} parent=5 // pred_fallthru
        _
      %p317 = scmp.le.s32.totalorder 1, %s19
      %p318 = scmp.lt.s32.totalorder %s19, 3
      %p319 = pnand %p317, %p318
      %p320 = pneg %p319
      // Predicated region
      $region53: #{tpu_custom_call.1} parent=5 // pred_check
        _
      $region54: #{tpu_custom_call.1} parent=5 // pred_check_branch
        %322 = sbr.rel (%p319) target = $region56
      $region55: #{tpu_custom_call.1} parent=5 // pred_region
        %s323 = ssub.s32 %s19, 1
        %p324 = pneg %p52
        %p325 = pneg %p49
        %p326 = scmp.lt.s32.totalorder %s28, 1
        %s327 = scalar_select %p326, %s28, 1
        %p328 = scmp.lt.s32.totalorder %s29, 0
        %s329 = scalar_select %p328, %s29, 0
        %s330 = sadd.s32 %s329, %s327
        %s331 = smul.addr %s330, 4
        %s332 = scalar_lea.vmem %s1, %s331
        %p333 = pneg %p80
        %p334 = pneg %p77
        %p335 = scmp.lt.s32.totalorder %s28, 1
        %s336 = scalar_select %p335, %s28, 1
        %s337 = smul.addr %s336, 8
        %s338 = scalar_lea.vmem %s2, %s337
        %p339 = pneg %p106
        %p340 = pneg %p103
        %p341 = pneg %p127
        %p342 = pneg %p124
        %p343 = pneg %p148
        %p344 = pneg %p145
        %p345 = pneg %p169
        %p346 = pneg %p166
        %p347 = pneg %p190
        %p348 = pneg %p187
        %p349 = pneg %p211
        %p350 = pneg %p208
        %p351 = pneg %p232
        %p352 = pneg %p229
        %p353 = pneg %p260
        %p354 = pneg %p257
        %s355 = sand.u32 %s247, 1
        %s356 = scalar_lea.sflag [#allocation6], %s355
        %s357 = sand.u32 %s247, 1
        %s358 = smul.addr %s357, 4
        %s359 = scalar_lea.vmem [#allocation5], %s358
        %p360 = scmp.lt.s32.totalorder %s28, 1
        %s361 = scalar_select %p360, %s28, 1
        %p362 = scmp.lt.s32.totalorder %s29, 0
        %s363 = scalar_select %p362, %s29, 0
        %s364 = sadd.s32 %s363, %s361
        %s365 = smul.addr %s364, 4
        %s366 = scalar_lea.vmem %s1, %s365
        %p367 = scmp.lt.s32.totalorder %s28, 1
        %s368 = scalar_select %p367, %s28, 1
        %s369 = smul.addr %s368, 8
        %s370 = scalar_lea.vmem %s2, %s369
        %p371 = scmp.eq.s32.totalorder %s29, 0
        // Predicated region
        $region57: #{tpu_custom_call.1} parent=55 // pred_check
          %p372 = pneg %p371
        $region58: #{tpu_custom_call.1} parent=55 // pred_check_branch
          %374 = sbr.rel (%p372) target = $region60
        $region59: #{tpu_custom_call.1} parent=55 // pred_region
          %v375 = vld [vmem:[%s370] sm:$0x3f]
          %v376 = vld [vmem:[%s5] sm:$0xf]
          %v377 = vld [vmem:[%s6] sm:$0xf]
          %379 = vset.pattern.permute.xlu0 0
          %380 = vperm.xlu0 %379, %v377
          %v381 = vpop.permute.xlu0 %380
          %vm383 = vcmask 48128
          %v385 = vsel %vm383, %v376, 0
          %vm387 = vcmask 1045504
          %v389 = vsel %vm387, %v375, 0
          %391 = vmatprep.subr.mxu0 0.0
          %392 = vmatpush1.msra.mxu0 0.0
          %393 = vmatprep.subr.mxu0 0.0
          %394 = vmatpush1.msra.mxu0 0.0
          %395 = vmatprep.subr.mxu0 0.0
          %396 = vmatpush1.msra.mxu0 0.0
          %397 = vmatprep.subr.mxu0 0.0
          %398 = vmatpush1.msra.mxu0 0.0
          %399 = vmatprep.subr.mxu0 0.0
          %400 = vmatpush1.msra.mxu0 0.0
          %401 = vmatprep.subr.mxu0 0.0
          %402 = vmatpush1.msra.mxu0 0.0
          %403 = vmatprep.subr.mxu0 0.0
          %404 = vmatpush1.msra.mxu0 0.0
          %405 = vmatprep.subr.mxu0 0.0
          %406 = vmatpush1.msra.mxu0 0.0
          %407 = vmatprep.subr.mxu0 0.0
          %408 = vmatpush1.msra.mxu0 0.0
          %409 = vmatprep.subr.mxu0 0.0
          %410 = vmatpush1.msra.mxu0 0.0
          %411 = vmatprep.subr.mxu0 0.0
          %412 = vmatpush1.msra.mxu0 0.0
          %413 = vmatprep.subr.mxu0 0.0
          %414 = vmatpush1.msra.mxu0 0.0
          %415 = vmatprep.subr.mxu0 0.0
          %416 = vmatpush1.msra.mxu0 0.0
          %417 = vmatprep.subr.mxu0 0.0
          %418 = vmatpush1.msra.mxu0 0.0
          %419 = vmatprep.subr.mxu0 0.0
          %420 = vmatpush1.msra.mxu0 0.0
          %421 = vmatprep.subr.mxu0 0.0
          %422 = vmatpush1.msra.mxu0 %v389
          %423 = vmatprep.subr.mxu0 0.0
          %424 = vmatpush2.msra.mxu0 0.0
          %425 = vmatprep.subr.mxu0 0.0
          %426 = vmatpush2.msra.mxu0 0.0
          %427 = vmatprep.subr.mxu0 0.0
          %428 = vmatpush2.msra.mxu0 0.0
          %429 = vmatprep.subr.mxu0 0.0
          %430 = vmatpush2.msra.mxu0 0.0
          %431 = vmatprep.subr.mxu0 0.0
          %432 = vmatpush2.msra.mxu0 0.0
          %433 = vmatprep.subr.mxu0 0.0
          %434 = vmatpush2.msra.mxu0 0.0
          %435 = vmatprep.subr.mxu0 0.0
          %436 = vmatpush2.msra.mxu0 0.0
          %437 = vmatprep.subr.mxu0 0.0
          %438 = vmatpush2.msra.mxu0 0.0
          %439 = vmatprep.subr.mxu0 0.0
          %440 = vmatpush2.msra.mxu0 0.0
          %441 = vmatprep.subr.mxu0 0.0
          %442 = vmatpush2.msra.mxu0 0.0
          %443 = vmatprep.subr.mxu0 0.0
          %444 = vmatpush2.msra.mxu0 0.0
          %445 = vmatprep.subr.mxu0 0.0
          %446 = vmatpush2.msra.mxu0 0.0
          %447 = vmatprep.subr.mxu0 0.0
          %448 = vmatpush2.msra.mxu0 0.0
          %449 = vmatprep.subr.mxu0 0.0
          %450 = vmatpush2.msra.mxu0 0.0
          %451 = vmatprep.subr.mxu0 0.0
          %452 = vmatpush2.msra.mxu0 0.0
          %453 = vmatprep.subr.mxu0 0.0
          %454 = vmatpush2.msra.mxu0 0.0
          %455 = vmatprep.mubr.f32.mxu0 0.0
          %456 = vmatmul.mubr.f32.gmra.mxu0 %v385
          %v457 = vpop.f32.mrf.mxu0
          %v458 = vadd.f32 %v381, %v457
          %v459 = vpop.f32.mrf.mxu0
          %460 = vdwg.mxu0
          %v461 = vld [vmem:[%s7] sm:$0xf]
          %v462 = vld [vmem:[%s8] sm:$0xf]
          %464 = vset.pattern.permute.xlu0 0
          %465 = vperm.xlu0 %464, %v462
          %v466 = vpop.permute.xlu0 %465
          %v469 = vsel %vm383, %v461, 0
          %471 = vmatprep.subr.mxu0 0.0
          %472 = vmatpush1.msra.mxu0 0.0
          %473 = vmatprep.subr.mxu0 0.0
          %474 = vmatpush1.msra.mxu0 0.0
          %475 = vmatprep.subr.mxu0 0.0
          %476 = vmatpush1.msra.mxu0 0.0
          %477 = vmatprep.subr.mxu0 0.0
          %478 = vmatpush1.msra.mxu0 0.0
          %479 = vmatprep.subr.mxu0 0.0
          %480 = vmatpush1.msra.mxu0 0.0
          %481 = vmatprep.subr.mxu0 0.0
          %482 = vmatpush1.msra.mxu0 0.0
          %483 = vmatprep.subr.mxu0 0.0
          %484 = vmatpush1.msra.mxu0 0.0
          %485 = vmatprep.subr.mxu0 0.0
          %486 = vmatpush1.msra.mxu0 0.0
          %487 = vmatprep.subr.mxu0 0.0
          %488 = vmatpush1.msra.mxu0 0.0
          %489 = vmatprep.subr.mxu0 0.0
          %490 = vmatpush1.msra.mxu0 0.0
          %491 = vmatprep.subr.mxu0 0.0
          %492 = vmatpush1.msra.mxu0 0.0
          %493 = vmatprep.subr.mxu0 0.0
          %494 = vmatpush1.msra.mxu0 0.0
          %495 = vmatprep.subr.mxu0 0.0
          %496 = vmatpush1.msra.mxu0 0.0
          %497 = vmatprep.subr.mxu0 0.0
          %498 = vmatpush1.msra.mxu0 0.0
          %499 = vmatprep.subr.mxu0 0.0
          %500 = vmatpush1.msra.mxu0 0.0
          %501 = vmatprep.subr.mxu0 0.0
          %502 = vmatpush1.msra.mxu0 %v389
          %503 = vmatprep.subr.mxu0 0.0
          %504 = vmatpush2.msra.mxu0 0.0
          %505 = vmatprep.subr.mxu0 0.0
          %506 = vmatpush2.msra.mxu0 0.0
          %507 = vmatprep.subr.mxu0 0.0
          %508 = vmatpush2.msra.mxu0 0.0
          %509 = vmatprep.subr.mxu0 0.0
          %510 = vmatpush2.msra.mxu0 0.0
          %511 = vmatprep.subr.mxu0 0.0
          %512 = vmatpush2.msra.mxu0 0.0
          %513 = vmatprep.subr.mxu0 0.0
          %514 = vmatpush2.msra.mxu0 0.0
          %515 = vmatprep.subr.mxu0 0.0
          %516 = vmatpush2.msra.mxu0 0.0
          %517 = vmatprep.subr.mxu0 0.0
          %518 = vmatpush2.msra.mxu0 0.0
          %519 = vmatprep.subr.mxu0 0.0
          %520 = vmatpush2.msra.mxu0 0.0
          %521 = vmatprep.subr.mxu0 0.0
          %522 = vmatpush2.msra.mxu0 0.0
          %523 = vmatprep.subr.mxu0 0.0
          %524 = vmatpush2.msra.mxu0 0.0
          %525 = vmatprep.subr.mxu0 0.0
          %526 = vmatpush2.msra.mxu0 0.0
          %527 = vmatprep.subr.mxu0 0.0
          %528 = vmatpush2.msra.mxu0 0.0
          %529 = vmatprep.subr.mxu0 0.0
          %530 = vmatpush2.msra.mxu0 0.0
          %531 = vmatprep.subr.mxu0 0.0
          %532 = vmatpush2.msra.mxu0 0.0
          %533 = vmatprep.subr.mxu0 0.0
          %534 = vmatpush2.msra.mxu0 0.0
          %535 = vmatprep.mubr.f32.mxu0 0.0
          %536 = vmatmul.mubr.f32.gmra.mxu0 %v469
          %v537 = vpop.f32.mrf.mxu0
          %v538 = vadd.f32 %v466, %v537
          %v539 = vpop.f32.mrf.mxu0
          %540 = vdwg.mxu0
          %541 = vxpose.xlu0.b32.start [1/16] %v458, 128
          %542 = vxpose.xlu0.b32.cont [2/16] 0.0, 128
          %543 = vxpose.xlu0.b32.cont [3/16] 0.0, 128
          %544 = vxpose.xlu0.b32.cont [4/16] 0.0, 128
          %545 = vxpose.xlu0.b32.cont [5/16] 0.0, 128
          %546 = vxpose.xlu0.b32.cont [6/16] 0.0, 128
          %547 = vxpose.xlu0.b32.cont [7/16] 0.0, 128
          %548 = vxpose.xlu0.b32.cont [8/16] 0.0, 128
          %549 = vxpose.xlu0.b32.cont [9/16] 0.0, 128
          %550 = vxpose.xlu0.b32.cont [10/16] 0.0, 128
          %551 = vxpose.xlu0.b32.cont [11/16] 0.0, 128
          %552 = vxpose.xlu0.b32.cont [12/16] 0.0, 128
          %553 = vxpose.xlu0.b32.cont [13/16] 0.0, 128
          %554 = vxpose.xlu0.b32.cont [14/16] 0.0, 128
          %555 = vxpose.xlu0.b32.cont [15/16] 0.0, 128
          %556 = vxpose.xlu0.b32.end [16/16] 0.0, 128
          %v557 = vpop.trf.xlu0
          %v558 = vpop.trf.xlu0
          %v559 = vpop.trf.xlu0
          %v560 = vpop.trf.xlu0
          %v561 = vpop.trf.xlu0
          %v562 = vpop.trf.xlu0
          %v563 = vpop.trf.xlu0
          %v564 = vpop.trf.xlu0
          %v565 = vpop.trf.xlu0
          %v566 = vpop.trf.xlu0
          %v567 = vpop.trf.xlu0
          %v568 = vpop.trf.xlu0
          %v569 = vpop.trf.xlu0
          %v570 = vpop.trf.xlu0
          %v571 = vpop.trf.xlu0
          %v572 = vpop.trf.xlu0
          %vm573 = vcmask 31744
          %574 = vst.msk [vmem:[#allocation2] sm:$0xff] %vm573, %v557
          %575 = vst.msk [vmem:[#allocation2 + $0x8] sm:$0xff] %vm573, %v558
          %vm576 = vcmask 125952
          %577 = vst.msk [vmem:[#allocation3] sm:$0xf] %vm576, %v538
        $region60: #{tpu_custom_call.1} parent=55 // pred_fallthru
          _
        %v578 = vld [vmem:[%s366] sm:$0xf]
        %v579 = vld [vmem:[%s3] sm:$0xf]
        %v580 = vld [vmem:[%s4] sm:$0xf]
        %582 = vset.pattern.permute.xlu0 0
        %583 = vperm.xlu0 %582, %v580
        %v584 = vpop.permute.xlu0 %583
        %vm586 = vcmask 31744
        %v588 = vsel %vm586, %v579, 0
        %vm590 = vcmask 1043456
        %v592 = vsel %vm590, %v578, 0
        %594 = vmatprep.subr.mxu0 0.0
        %595 = vmatpush1.msra.mxu0 0.0
        %596 = vmatprep.subr.mxu0 0.0
        %597 = vmatpush1.msra.mxu0 0.0
        %598 = vmatprep.subr.mxu0 0.0
        %599 = vmatpush1.msra.mxu0 0.0
        %600 = vmatprep.subr.mxu0 0.0
        %601 = vmatpush1.msra.mxu0 0.0
        %602 = vmatprep.subr.mxu0 0.0
        %603 = vmatpush1.msra.mxu0 0.0
        %604 = vmatprep.subr.mxu0 0.0
        %605 = vmatpush1.msra.mxu0 0.0
        %606 = vmatprep.subr.mxu0 0.0
        %607 = vmatpush1.msra.mxu0 0.0
        %608 = vmatprep.subr.mxu0 0.0
        %609 = vmatpush1.msra.mxu0 0.0
        %610 = vmatprep.subr.mxu0 0.0
        %611 = vmatpush1.msra.mxu0 0.0
        %612 = vmatprep.subr.mxu0 0.0
        %613 = vmatpush1.msra.mxu0 0.0
        %614 = vmatprep.subr.mxu0 0.0
        %615 = vmatpush1.msra.mxu0 0.0
        %616 = vmatprep.subr.mxu0 0.0
        %617 = vmatpush1.msra.mxu0 0.0
        %618 = vmatprep.subr.mxu0 0.0
        %619 = vmatpush1.msra.mxu0 0.0
        %620 = vmatprep.subr.mxu0 0.0
        %621 = vmatpush1.msra.mxu0 0.0
        %622 = vmatprep.subr.mxu0 0.0
        %623 = vmatpush1.msra.mxu0 0.0
        %624 = vmatprep.subr.mxu0 0.0
        %625 = vmatpush1.msra.mxu0 %v592
        %626 = vmatprep.subr.mxu0 0.0
        %627 = vmatpush2.msra.mxu0 0.0
        %628 = vmatprep.subr.mxu0 0.0
        %629 = vmatpush2.msra.mxu0 0.0
        %630 = vmatprep.subr.mxu0 0.0
        %631 = vmatpush2.msra.mxu0 0.0
        %632 = vmatprep.subr.mxu0 0.0
        %633 = vmatpush2.msra.mxu0 0.0
        %634 = vmatprep.subr.mxu0 0.0
        %635 = vmatpush2.msra.mxu0 0.0
        %636 = vmatprep.subr.mxu0 0.0
        %637 = vmatpush2.msra.mxu0 0.0
        %638 = vmatprep.subr.mxu0 0.0
        %639 = vmatpush2.msra.mxu0 0.0
        %640 = vmatprep.subr.mxu0 0.0
        %641 = vmatpush2.msra.mxu0 0.0
        %642 = vmatprep.subr.mxu0 0.0
        %643 = vmatpush2.msra.mxu0 0.0
        %644 = vmatprep.subr.mxu0 0.0
        %645 = vmatpush2.msra.mxu0 0.0
        %646 = vmatprep.subr.mxu0 0.0
        %647 = vmatpush2.msra.mxu0 0.0
        %648 = vmatprep.subr.mxu0 0.0
        %649 = vmatpush2.msra.mxu0 0.0
        %650 = vmatprep.subr.mxu0 0.0
        %651 = vmatpush2.msra.mxu0 0.0
        %652 = vmatprep.subr.mxu0 0.0
        %653 = vmatpush2.msra.mxu0 0.0
        %654 = vmatprep.subr.mxu0 0.0
        %655 = vmatpush2.msra.mxu0 0.0
        %656 = vmatprep.subr.mxu0 0.0
        %657 = vmatpush2.msra.mxu0 0.0
        %658 = vmatprep.mubr.f32.mxu0 0.0
        %659 = vmatmul.mubr.f32.gmra.mxu0 %v588
        %v660 = vpop.f32.mrf.mxu0
        %v661 = vadd.f32 %v584, %v660
        %v662 = vpop.f32.mrf.mxu0
        %663 = vdwg.mxu0
        %v664 = vld [vmem:[#allocation2] sm:$0xff]
        %v665 = vld [vmem:[#allocation2 + $0x8] sm:$0xff]
        %v667 = vsel %vm586, %v664, 0
        %v670 = vsel %vm586, %v665, 0
        %v673 = vsel %vm590, %v661, 0
        %675 = vmatprep.subr.mxu0 0.0
        %676 = vmatpush1.msra.mxu0 0.0
        %677 = vmatprep.subr.mxu0 0.0
        %678 = vmatpush1.msra.mxu0 0.0
        %679 = vmatprep.subr.mxu0 0.0
        %680 = vmatpush1.msra.mxu0 0.0
        %681 = vmatprep.subr.mxu0 0.0
        %682 = vmatpush1.msra.mxu0 0.0
        %683 = vmatprep.subr.mxu0 0.0
        %684 = vmatpush1.msra.mxu0 0.0
        %685 = vmatprep.subr.mxu0 0.0
        %686 = vmatpush1.msra.mxu0 0.0
        %687 = vmatprep.subr.mxu0 0.0
        %688 = vmatpush1.msra.mxu0 0.0
        %689 = vmatprep.subr.mxu0 0.0
        %690 = vmatpush1.msra.mxu0 0.0
        %691 = vmatprep.subr.mxu0 0.0
        %692 = vmatpush1.msra.mxu0 0.0
        %693 = vmatprep.subr.mxu0 0.0
        %694 = vmatpush1.msra.mxu0 0.0
        %695 = vmatprep.subr.mxu0 0.0
        %696 = vmatpush1.msra.mxu0 0.0
        %697 = vmatprep.subr.mxu0 0.0
        %698 = vmatpush1.msra.mxu0 0.0
        %699 = vmatprep.subr.mxu0 0.0
        %700 = vmatpush1.msra.mxu0 0.0
        %701 = vmatprep.subr.mxu0 0.0
        %702 = vmatpush1.msra.mxu0 0.0
        %703 = vmatprep.subr.mxu0 0.0
        %704 = vmatpush1.msra.mxu0 0.0
        %705 = vmatprep.subr.mxu0 0.0
        %706 = vmatpush1.msra.mxu0 %v673
        %707 = vmatprep.subr.mxu0 0.0
        %708 = vmatpush2.msra.mxu0 0.0
        %709 = vmatprep.subr.mxu0 0.0
        %710 = vmatpush2.msra.mxu0 0.0
        %711 = vmatprep.subr.mxu0 0.0
        %712 = vmatpush2.msra.mxu0 0.0
        %713 = vmatprep.subr.mxu0 0.0
        %714 = vmatpush2.msra.mxu0 0.0
        %715 = vmatprep.subr.mxu0 0.0
        %716 = vmatpush2.msra.mxu0 0.0
        %717 = vmatprep.subr.mxu0 0.0
        %718 = vmatpush2.msra.mxu0 0.0
        %719 = vmatprep.subr.mxu0 0.0
        %720 = vmatpush2.msra.mxu0 0.0
        %721 = vmatprep.subr.mxu0 0.0
        %722 = vmatpush2.msra.mxu0 0.0
        %723 = vmatprep.subr.mxu0 0.0
        %724 = vmatpush2.msra.mxu0 0.0
        %725 = vmatprep.subr.mxu0 0.0
        %726 = vmatpush2.msra.mxu0 0.0
        %727 = vmatprep.subr.mxu0 0.0
        %728 = vmatpush2.msra.mxu0 0.0
        %729 = vmatprep.subr.mxu0 0.0
        %730 = vmatpush2.msra.mxu0 0.0
        %731 = vmatprep.subr.mxu0 0.0
        %732 = vmatpush2.msra.mxu0 0.0
        %733 = vmatprep.subr.mxu0 0.0
        %734 = vmatpush2.msra.mxu0 0.0
        %735 = vmatprep.subr.mxu0 0.0
        %736 = vmatpush2.msra.mxu0 0.0
        %737 = vmatprep.subr.mxu0 0.0
        %738 = vmatpush2.msra.mxu0 0.0
        %739 = vmatprep.mubr.f32.mxu0 0.0
        %740 = vmatmul.mubr.f32.gmra.mxu0 %v667
        %v741 = vpop.f32.mrf.mxu0
        %v742 = vadd.f32 0.0, %v741
        %v743 = vpop.f32.mrf.mxu0
        %744 = vmatprep.mubr.f32.mxu0 0.0
        %745 = vmatmul.mubr.f32.gmra.mxu0 %v670
        %v746 = vpop.f32.mrf.mxu0
        %v747 = vadd.f32 0.0, %v746
        %v748 = vpop.f32.mrf.mxu0
        %749 = vdwg.mxu0
        %vm750 = vcmask 523264
        %v751 = vsel %vm750, %v742, -inf
        %v752 = vsel %vm750, %v747, -inf
        %v753 = vmax.f32 %v751, %v752
        %v754 = vrot.slane %v753, 4
        %v755 = vmax.f32 %v753, %v754
        %v756 = vrot.slane %v755, 2
        %v757 = vmax.f32 %v755, %v756
        %v758 = vrot.slane %v757, 1
        %v759 = vmax.f32 %v757, %v758
        %v760 = vsub.f32 %v742, %v759
        %v761 = vsub.f32 %v747, %v759
        %v762 = vmul.f32 %v760, 1.442695
        %v763 = vpow.pop %v762
        %v764 = vmul.f32 %v761, 1.442695
        %v765 = vpow.pop %v764
        %v766 = vsel %vm750, %v763, 0.0
        %v767 = vsel %vm750, %v765, 0.0
        %v768 = vadd.f32 %v766, %v767
        %v769 = vrot.slane %v768, 4
        %v770 = vadd.f32 %v768, %v769
        %v771 = vrot.slane %v770, 2
        %v772 = vadd.f32 %v770, %v771
        %v773 = vrot.slane %v772, 1
        %v774 = vadd.f32 %v772, %v773
        %v775 = vrcp.pop %v774
        %v776 = vld [vmem:[#allocation3] sm:$0xf]
        %vm777 = vcmask 130048
        %v779 = vsel %vm777, %v776, 0
        %781 = vmatprep.subr.mxu0 0.0
        %782 = vmatpush1.msra.mxu0 0.0
        %783 = vmatprep.subr.mxu0 0.0
        %784 = vmatpush1.msra.mxu0 0.0
        %785 = vmatprep.subr.mxu0 0.0
        %786 = vmatpush1.msra.mxu0 0.0
        %787 = vmatprep.subr.mxu0 0.0
        %788 = vmatpush1.msra.mxu0 0.0
        %789 = vmatprep.subr.mxu0 0.0
        %790 = vmatpush1.msra.mxu0 0.0
        %791 = vmatprep.subr.mxu0 0.0
        %792 = vmatpush1.msra.mxu0 0.0
        %793 = vmatprep.subr.mxu0 0.0
        %794 = vmatpush1.msra.mxu0 0.0
        %795 = vmatprep.subr.mxu0 0.0
        %796 = vmatpush1.msra.mxu0 0.0
        %797 = vmatprep.subr.mxu0 0.0
        %798 = vmatpush1.msra.mxu0 0.0
        %799 = vmatprep.subr.mxu0 0.0
        %800 = vmatpush1.msra.mxu0 0.0
        %801 = vmatprep.subr.mxu0 0.0
        %802 = vmatpush1.msra.mxu0 0.0
        %803 = vmatprep.subr.mxu0 0.0
        %804 = vmatpush1.msra.mxu0 0.0
        %805 = vmatprep.subr.mxu0 0.0
        %806 = vmatpush1.msra.mxu0 0.0
        %807 = vmatprep.subr.mxu0 0.0
        %808 = vmatpush1.msra.mxu0 0.0
        %809 = vmatprep.subr.mxu0 0.0
        %810 = vmatpush1.msra.mxu0 %v765
        %811 = vmatprep.subr.mxu0 0.0
        %812 = vmatpush1.msra.mxu0 %v763
        %813 = vmatprep.subr.mxu0 0.0
        %814 = vmatpush2.msra.mxu0 0.0
        %815 = vmatprep.subr.mxu0 0.0
        %816 = vmatpush2.msra.mxu0 0.0
        %817 = vmatprep.subr.mxu0 0.0
        %818 = vmatpush2.msra.mxu0 0.0
        %819 = vmatprep.subr.mxu0 0.0
        %820 = vmatpush2.msra.mxu0 0.0
        %821 = vmatprep.subr.mxu0 0.0
        %822 = vmatpush2.msra.mxu0 0.0
        %823 = vmatprep.subr.mxu0 0.0
        %824 = vmatpush2.msra.mxu0 0.0
        %825 = vmatprep.subr.mxu0 0.0
        %826 = vmatpush2.msra.mxu0 0.0
        %827 = vmatprep.subr.mxu0 0.0
        %828 = vmatpush2.msra.mxu0 0.0
        %829 = vmatprep.subr.mxu0 0.0
        %830 = vmatpush2.msra.mxu0 0.0
        %831 = vmatprep.subr.mxu0 0.0
        %832 = vmatpush2.msra.mxu0 0.0
        %833 = vmatprep.subr.mxu0 0.0
        %834 = vmatpush2.msra.mxu0 0.0
        %835 = vmatprep.subr.mxu0 0.0
        %836 = vmatpush2.msra.mxu0 0.0
        %837 = vmatprep.subr.mxu0 0.0
        %838 = vmatpush2.msra.mxu0 0.0
        %839 = vmatprep.subr.mxu0 0.0
        %840 = vmatpush2.msra.mxu0 0.0
        %841 = vmatprep.subr.mxu0 0.0
        %842 = vmatpush2.msra.mxu0 0.0
        %843 = vmatprep.subr.mxu0 0.0
        %844 = vmatpush2.msra.mxu0 0.0
        %845 = vmatprep.mubr.f32.mxu0 0.0
        %846 = vmatmul.mubr.f32.gmra.mxu0 %v779
        %v847 = vpop.f32.mrf.mxu0
        %v848 = vadd.f32 0.0, %v847
        %v849 = vpop.f32.mrf.mxu0
        %850 = vdwg.mxu0
        %s851 = sld [smem:[#allocation4]]
        %v852 = vstv %s851
        %v853 = vmul.f32 %v852, %v775
        %v854 = vmul.f32 %v848, %v853
        %v855 = vadd.f32 %v854, %v578
        %vm856 = vcmask 519168
        %857 = vst.msk [vmem:[%s359] sm:$0xf] %vm856, %v855
        %s858 = sand.u32 %s247, 1
        %s859 = scalar_lea.sflag [#allocation6], %s858
        %s860 = sand.u32 %s247, 1
        %s861 = smul.addr %s860, 4
        %s862 = scalar_lea.vmem [#allocation5], %s861
        // Predicated region
        $region61: #{tpu_custom_call.1} parent=55 // pred_check
          %p863 = pneg %p257
        $region62: #{tpu_custom_call.1} parent=55 // pred_check_branch
          %865 = sbr.rel (%p863) target = $region64
        $region63: #{tpu_custom_call.1} parent=55 // pred_region
          %s867 = ssub.s32 64, 64
          %868 = vsyncadd %s859, %s867
          %s869 = sadd.s32 %s29, %s28
          %s870 = smul.addr %s869, 64
          %s871 = scalar_lea.hbm %s9, %s870
          %s873 = sshll.u32 %s862, 4
          %s874 = int_to_ptr.vmem [resolvable:$true] %s873
          %876 = dma.vmem_to_hbm [thread:$0]  %s874, 64, %s871, %s859
        $region64: #{tpu_custom_call.1} parent=55 // pred_fallthru
          _
      $region56: #{tpu_custom_call.1} parent=5 // pred_fallthru
        _
      %p877 = scmp.le.s32.totalorder 2, %s19
      // Predicated region
      $region65: #{tpu_custom_call.1} parent=5 // pred_check
        %p878 = pneg %p877
      $region66: #{tpu_custom_call.1} parent=5 // pred_check_branch
        %880 = sbr.rel (%p878) target = $region68
      $region67: #{tpu_custom_call.1} parent=5 // pred_region
        %s881 = ssub.s32 %s19, 2
        // Predicated region
        $region69: #{tpu_custom_call.1} parent=67 // pred_check
          %p882 = pneg %p263
        $region70: #{tpu_custom_call.1} parent=67 // pred_check_branch
          %884 = sbr.rel (%p882) target = $region72
        $region71: #{tpu_custom_call.1} parent=67 // pred_region
          %s885 = sand.u32 %s248, 1
          %s886 = scalar_lea.sflag [#allocation6], %s885
          %s887 = sand.u32 %s248, 1
          %s888 = smul.addr %s887, 4
          %s889 = scalar_lea.vmem [#allocation5], %s888
          %890 = dma.done %s886, 64
        $region72: #{tpu_custom_call.1} parent=67 // pred_fallthru
          _
      $region68: #{tpu_custom_call.1} parent=5 // pred_fallthru
        _
    $region6: #{tpu_custom_call.1} parent=1 // loop_footer
      %s23 = sadd.s32 1, %s19
    $region7: #{tpu_custom_call.1} parent=1 // loop_footer_branch
      %18 = sbr.rel target = $region3
    $region8: #{tpu_custom_call.1} parent=1 // loop_exit
      _
    %891 = vsyncpa [#allocation6], 1
    %s892 = scalar_lea.sflag [#allocation6], 1
    %893 = vsyncpa %s892, 1

</llo_original>
